<compile_context>
chip_gen: v7x
topology: tpu7x:2x2x1
jax: 0.10.0
libtpu: 0.0.40
codegen_flags: <defaults>
</compile_context>

<pallas_src>
import functools

import jax
import jax.numpy as jnp
from jax.experimental import pallas as pl
from jax.experimental.pallas import tpu as pltpu

BN_EPS = 1e-5


def _round_up(x, m):
    return (x + m - 1) // m * m


def _vmem_limit_bytes():
    # generation-aware scoped-VMEM budget (v7x has only 64 MiB physical VMEM)
    try:
        cap = int(pltpu.get_tpu_info().vmem_capacity_bytes)
        return max(32 * 1024 * 1024, min(int(cap * 0.6), 64 * 1024 * 1024))
    except Exception:
        return 48 * 1024 * 1024


VMEM_LIMIT = _vmem_limit_bytes()


def _pick_tile(d, t=512):
    return t if (d > t and d % t == 0) else d


def _m_tile(m):
    return 512 if m >= 512 else _round_up(m, 16)


def _pick_hw_tile(hw, cap=512):
    if hw <= cap:
        return hw
    for c in (cap, 2048, 4096):
        best = 0
        for d in range(8, min(hw, c) + 1, 8):
            if hw % d == 0:
                best = d
        if best:
            return best
    return hw  # TODO(synk): awkward HW with no small divisor falls back to one full tile.


# ----------------------------------------------------------------------------
# Kernel 1: tiled bf16 matmul + fused per-channel scale/bias (+ optional ReLU).
# Used for the stem (im2col) and all 1x1 convs; bf16 output.
# ----------------------------------------------------------------------------
def _mm_kernel(a_ref, b_ref, s_ref, c_ref, o_ref, acc_ref, *, act, nk):
    @pl.when(pl.program_id(2) == 0)
    def _():
        acc_ref[...] = jnp.zeros_like(acc_ref)

    acc_ref[...] += jnp.dot(a_ref[...], b_ref[...],
                            preferred_element_type=jnp.float32)

    @pl.when(pl.program_id(2) == nk - 1)
    def _():
        y = acc_ref[...] * s_ref[...] + c_ref[...]
        if act:
            y = jnp.maximum(y, 0.0)
        o_ref[...] = y.astype(o_ref.dtype)


@functools.partial(jax.jit, static_argnames=("act",))
def matmul_scale_bias(a, b, scale, bias, act):
    # a: (M, K) bf16; b: (K, N) bf16; scale/bias: (1, N) f32 -> bf16 (M, N)
    M, K = a.shape
    N = b.shape[1]
    tm = _m_tile(M)
    Mp = _round_up(M, tm)
    if Mp != M:
        a = jnp.pad(a, ((0, Mp - M), (0, 0)))
    tk = _pick_tile(K, 512)
    tn = 512 if N % 512 == 0 else (256 if N % 256 == 0 else N)
    nk = K // tk
    kern = functools.partial(_mm_kernel, act=act, nk=nk)
    out = pl.pallas_call(
        kern,
        out_shape=jax.ShapeDtypeStruct((Mp, N), jnp.bfloat16),
        grid_spec=pltpu.PrefetchScalarGridSpec(
            num_scalar_prefetch=0,
            grid=(Mp // tm, N // tn, nk),
            in_specs=[
                pl.BlockSpec((tm, tk), lambda i, j, k: (i, k)),
                pl.BlockSpec((tk, tn), lambda i, j, k: (k, j)),
                pl.BlockSpec((1, tn), lambda i, j, k: (0, j)),
                pl.BlockSpec((1, tn), lambda i, j, k: (0, j)),
            ],
            out_specs=pl.BlockSpec((tm, tn), lambda i, j, k: (i, j)),
            scratch_shapes=[pltpu.VMEM((tm, tn), jnp.float32)],
        ),
        compiler_params=pltpu.CompilerParams(
            dimension_semantics=("parallel", "parallel", "arbitrary"),
            vmem_limit_bytes=VMEM_LIMIT),
    )(a, b, scale, bias)
    return out[:M] if Mp != M else out


# ----------------------------------------------------------------------------
# Kernel 2: conv3 (1x1) matmul + folded BN epilogue + FUSED SE global average
# pool (second output, accumulated across HW tiles / k steps).
# ----------------------------------------------------------------------------
def _mm_pool_kernel(a_ref, b_ref, s_ref, c_ref, o_ref, p_ref, acc_ref, *, nk, inv):
    hw = pl.program_id(2)
    k = pl.program_id(3)

    @pl.when(k == 0)
    def _():
        acc_ref[...] = jnp.zeros_like(acc_ref)

    acc_ref[...] += jnp.dot(a_ref[0], b_ref[...],
                            preferred_element_type=jnp.float32)

    @pl.when(jnp.logical_and(hw == 0, k == 0))
    def _():
        p_ref[...] = jnp.zeros_like(p_ref)

    @pl.when(k == nk - 1)
    def _():
        y = acc_ref[...] * s_ref[...] + c_ref[...]
        o_ref[0] = y.astype(o_ref.dtype)
        p_ref[...] += jnp.sum(y, axis=0, keepdims=True) * inv


@jax.jit
def matmul_scale_bias_pool(a, b, scale, bias):
    # a: (N, HW, K) bf16; b: (K, Cout) bf16 -> bf16 (N, HW, Cout), f32 mean (N, Cout)
    N, HW, K = a.shape
    Cout = b.shape[1]
    thw = _pick_hw_tile(HW)
    tk = _pick_tile(K, 512)
    tn = 512 if Cout % 512 == 0 else (256 if Cout % 256 == 0 else Cout)
    nhw, nk = HW // thw, K // tk
    kern = functools.partial(_mm_pool_kernel, nk=nk, inv=1.0 / HW)
    out, pool = pl.pallas_call(
        kern,
        out_shape=(jax.ShapeDtypeStruct((N, HW, Cout), jnp.bfloat16),
                   jax.ShapeDtypeStruct((N, Cout), jnp.float32)),
        grid_spec=pltpu.PrefetchScalarGridSpec(
            num_scalar_prefetch=0,
            grid=(N, Cout // tn, nhw, nk),
            in_specs=[
                pl.BlockSpec((1, thw, tk), lambda n, j, hw, k: (n, hw, k)),
                pl.BlockSpec((tk, tn), lambda n, j, hw, k: (k, j)),
                pl.BlockSpec((1, tn), lambda n, j, hw, k: (0, j)),
                pl.BlockSpec((1, tn), lambda n, j, hw, k: (0, j)),
            ],
            out_specs=(pl.BlockSpec((1, thw, tn), lambda n, j, hw, k: (n, hw, j)),
                       pl.BlockSpec((1, tn), lambda n, j, hw, k: (n, j))),
            scratch_shapes=[pltpu.VMEM((thw, tn), jnp.float32)],
        ),
        compiler_params=pltpu.CompilerParams(
            dimension_semantics=("parallel", "parallel", "arbitrary", "arbitrary"),
            vmem_limit_bytes=VMEM_LIMIT),
    )(a, b, scale, bias)
    return out, pool


# ----------------------------------------------------------------------------
# Implicit-GEMM "tap canvas" helpers (shared by grouped 3x3 conv and max-pool).
# The canvas holds the padded / phase-split NHWC image flattened to (Hq*Wq, C);
# tap (di, dj) is a contiguous row window at a static offset inside the canvas.
# ----------------------------------------------------------------------------
def _make_taps(ksize, stride, wq):
    s = stride
    return tuple(((di % s) * s + (dj % s), (di // s) * wq + (dj // s))
                 for di in range(ksize) for dj in range(ksize))


def build_tap_canvas(xp, ksize, stride, OH, OW):
    # xp: (N, Hp, Wp, C) already padded for the op.
    # Returns canvas (s*s, N, Hq*Wq, C) bf16, wq, mw (wide row count, mult of 8).
    N, Hp, Wp, C = xp.shape
    s = stride
    mo = (ksize - 1) // s
    wq = OW + mo
    mw = _round_up((OH - 1) * wq + OW, 8)
    hq = -(-(mw + mo * wq + mo) // wq)
    need_h, need_w = s * hq + s, s * wq + s
    xp = jnp.pad(xp, ((0, 0), (0, max(0, need_h - Hp)),
                      (0, max(0, need_w - Wp)), (0, 0)))
    planes = [xp[:, ph:ph + s * hq:s, pw:pw + s * wq:s, :]
              for ph in range(s) for pw in range(s)]
    canvas = jnp.stack(planes, axis=0).reshape(s * s, N, hq * wq, C)
    return canvas.astype(jnp.bfloat16), wq, mw


def _dewiden(wide, OH, OW, wq):
    # wide: (N, mw, C) -> (N, OH, OW, C), trimming the per-row garbage columns.
    N, mw, C = wide.shape
    ohw = OH * wq
    if mw >= ohw:
        w = wide[:, :ohw, :]
    else:
        w = jnp.pad(wide, ((0, 0), (0, ohw - mw), (0, 0)))
    return w.reshape(N, OH, wq, C)[:, :, :OW, :]


# ----------------------------------------------------------------------------
# Kernel 3: grouped 3x3 conv as implicit GEMM over 9 taps, with block-diagonal
# "super-group" weights (128 lane-dense output channels per grid step).
# ----------------------------------------------------------------------------
def _gconv_kernel(x_ref, w_ref, s_ref, c_ref, o_ref, acc_ref, *, taps, act):
    mw = acc_ref.shape[0]
    for t, (p, off) in enumerate(taps):
        a = x_ref[p, 0, off:off + mw, :]
        contrib = jnp.dot(a, w_ref[0, t], preferred_element_type=jnp.float32)
        if t == 0:
            acc_ref[...] = contrib
        else:
            acc_ref[...] += contrib
    y = acc_ref[...] * s_ref[...] + c_ref[...]
    if act:
        y = jnp.maximum(y, 0.0)
    o_ref[0] = y.astype(o_ref.dtype)


@functools.partial(jax.jit, static_argnames=("stride", "wq", "mw", "act"))
def gconv_matmul(canvas, w, scale, bias, *, stride, wq, mw, act):
    # canvas: (s*s, N, Hq*Wq, Cin) bf16; w: (nSG, 9, SGK, L) bf16 block-diagonal;
    # scale/bias: (1, nSG*L) f32 -> wide output (N, mw, nSG*L) bf16
    s2, N, HWq, Cin = canvas.shape
    nSG, KK, SGK, L = w.shape
    taps = _make_taps(3, stride, wq)
    kern = functools.partial(_gconv_kernel, taps=taps, act=act)
    return pl.pallas_call(
        kern,
        out_shape=jax.ShapeDtypeStruct((N, mw, nSG * L), jnp.bfloat16),
        grid_spec=pltpu.PrefetchScalarGridSpec(
            num_scalar_prefetch=0,
            grid=(nSG, N),
            in_specs=[
                pl.BlockSpec((s2, 1, HWq, SGK), lambda s, n: (0, n, 0, s)),
                pl.BlockSpec((1, KK, SGK, L), lambda s, n: (s, 0, 0, 0)),
                pl.BlockSpec((1, L), lambda s, n: (0, s)),
                pl.BlockSpec((1, L), lambda s, n: (0, s)),
            ],
            out_specs=pl.BlockSpec((1, mw, L), lambda s, n: (n, 0, s)),
            scratch_shapes=[pltpu.VMEM((mw, L), jnp.float32)],
        ),
        compiler_params=pltpu.CompilerParams(
            dimension_semantics=("parallel", "parallel"),
            vmem_limit_bytes=VMEM_LIMIT),
    )(canvas, w, scale, bias)


# ----------------------------------------------------------------------------
# Kernel 4: stem 3x3/s2 max pool as running max over 9 canvas taps.
# ----------------------------------------------------------------------------
def _max_tap_kernel(x_ref, o_ref, *, taps):
    mw = o_ref.shape[1]
    p0, off0 = taps[0]
    o_ref[0] = x_ref[p0, 0, off0:off0 + mw, :]
    for p, off in taps[1:]:
        o_ref[0] = jnp.maximum(o_ref[0], x_ref[p, 0, off:off + mw, :])


@functools.partial(jax.jit, static_argnames=("stride", "wq", "mw"))
def maxpool_taps(canvas, *, stride, wq, mw):
    s2, N, HWq, C = canvas.shape
    taps = _make_taps(3, stride, wq)
    kern = functools.partial(_max_tap_kernel, taps=taps)
    return pl.pallas_call(
        kern,
        out_shape=jax.ShapeDtypeStruct((N, mw, C), jnp.bfloat16),
        grid_spec=pltpu.PrefetchScalarGridSpec(
            num_scalar_prefetch=0,
            grid=(N,),
            in_specs=[pl.BlockSpec((s2, 1, HWq, C), lambda n: (0, n, 0, 0))],
            out_specs=pl.BlockSpec((1, mw, C), lambda n: (n, 0, 0)),
        ),
        compiler_params=pltpu.CompilerParams(
            dimension_semantics=("parallel",),
            vmem_limit_bytes=VMEM_LIMIT),
    )(canvas)


# ----------------------------------------------------------------------------
# Kernel 5: global average pool over HW, tiled (head's adaptive_avg_pool2d).
# ----------------------------------------------------------------------------
def _avgpool_kernel(x_ref, o_ref, *, nhw, inv):
    @pl.when(pl.program_id(1) == 0)
    def _():
        o_ref[...] = jnp.zeros_like(o_ref)

    o_ref[...] += jnp.sum(x_ref[0].astype(jnp.float32), axis=0, keepdims=True)

    @pl.when(pl.program_id(1) == nhw - 1)
    def _():
        o_ref[...] = o_ref[...] * inv


@jax.jit
def global_avg_pool(x):
    # x: (N, HW, C) bf16 -> (N, C) f32
    N, HW, C = x.shape
    thw = _pick_hw_tile(HW)
    nhw = HW // thw
    kern = functools.partial(_avgpool_kernel, nhw=nhw, inv=1.0 / HW)
    return pl.pallas_call(
        kern,
        out_shape=jax.ShapeDtypeStruct((N, C), jnp.float32),
        grid_spec=pltpu.PrefetchScalarGridSpec(
            num_scalar_prefetch=0,
            grid=(N, nhw),
            in_specs=[pl.BlockSpec((1, thw, C), lambda n, h: (n, h, 0))],
            out_specs=pl.BlockSpec((1, C), lambda n, h: (n, 0)),
        ),
        compiler_params=pltpu.CompilerParams(
            dimension_semantics=("parallel", "arbitrary")),
    )(x)


# ----------------------------------------------------------------------------
# Kernel 6: SE excitation FCs batched over N: fc1 -> ReLU -> fc2 -> sigmoid
# ----------------------------------------------------------------------------
def _se_fc_kernel(p_ref, w1_ref, b1_ref, w2_ref, b2_ref, s_ref):
    h = jnp.dot(p_ref[...], w1_ref[...], preferred_element_type=jnp.float32) + b1_ref[...]
    h = jnp.maximum(h, 0.0)
    v = jnp.dot(h, w2_ref[...], preferred_element_type=jnp.float32) + b2_ref[...]
    s_ref[...] = 1.0 / (1.0 + jnp.exp(-v))


@jax.jit
def se_fc(pooled, w1, b1, w2, b2):
    N, C = pooled.shape
    Cr = w1.shape[1]
    return pl.pallas_call(
        _se_fc_kernel,
        out_shape=jax.ShapeDtypeStruct((N, C), jnp.float32),
        grid_spec=pltpu.PrefetchScalarGridSpec(
            num_scalar_prefetch=0,
            grid=(1,),
            in_specs=[
                pl.BlockSpec((N, C), lambda i: (0, 0)),
                pl.BlockSpec((C, Cr), lambda i: (0, 0)),
                pl.BlockSpec((1, Cr), lambda i: (0, 0)),
                pl.BlockSpec((Cr, C), lambda i: (0, 0)),
                pl.BlockSpec((1, C), lambda i: (0, 0)),
            ],
            out_specs=pl.BlockSpec((N, C), lambda i: (0, 0)),
        ),
    )(pooled, w1, b1, w2, b2)


# ----------------------------------------------------------------------------
# Kernel 7: SE channel scale + residual add + ReLU, tiled over HW (bf16 in/out)
# ----------------------------------------------------------------------------
def _scale_res_relu_kernel(x_ref, r_ref, s_ref, o_ref):
    y = x_ref[0].astype(jnp.float32) * s_ref[...] + r_ref[0].astype(jnp.float32)
    o_ref[0] = jnp.maximum(y, 0.0).astype(o_ref.dtype)


@jax.jit
def scale_residual_relu(x, r, s):
    # x, r: (N, HW, C) bf16; s: (N, C) f32 -> bf16
    N, HW, C = x.shape
    thw = _pick_hw_tile(HW)
    return pl.pallas_call(
        _scale_res_relu_kernel,
        out_shape=jax.ShapeDtypeStruct((N, HW, C), jnp.bfloat16),
        grid_spec=pltpu.PrefetchScalarGridSpec(
            num_scalar_prefetch=0,
            grid=(N, HW // thw),
            in_specs=[
                pl.BlockSpec((1, thw, C), lambda n, h: (n, h, 0)),
                pl.BlockSpec((1, thw, C), lambda n, h: (n, h, 0)),
                pl.BlockSpec((1, C), lambda n, h: (n, 0)),
            ],
            out_specs=pl.BlockSpec((1, thw, C), lambda n, h: (n, h, 0)),
        ),
        compiler_params=pltpu.CompilerParams(
            dimension_semantics=("parallel", "parallel"),
            vmem_limit_bytes=VMEM_LIMIT),
    )(x, r, s)


# ----------------------------------------------------------------------------
# Kernel 8: head = Linear(2048, 1) + BCEWithLogitsLoss on pooled features
# ----------------------------------------------------------------------------
def _head_kernel(p_ref, w_ref, b_ref, t_ref, out_ref, loss_ref):
    z = jnp.dot(p_ref[...], w_ref[...], preferred_element_type=jnp.float32) + b_ref[...]
    out_ref[...] = z
    t = t_ref[...]
    l = jnp.maximum(z, 0.0) - z * t + jnp.log(1.0 + jnp.exp(-jnp.abs(z)))
    loss_ref[...] = jnp.mean(l, keepdims=True)


@jax.jit
def head(pooled, w, b, t):
    N, C = pooled.shape
    return pl.pallas_call(
        _head_kernel,
        out_shape=(jax.ShapeDtypeStruct((N, 1), jnp.float32),
                   jax.ShapeDtypeStruct((1, 1), jnp.float32)),
        grid_spec=pltpu.PrefetchScalarGridSpec(
            num_scalar_prefetch=0,
            grid=(1,),
            in_specs=[
                pl.BlockSpec((N, C), lambda i: (0, 0)),
                pl.BlockSpec((C, 1), lambda i: (0, 0)),
                pl.BlockSpec((1, 1), lambda i: (0, 0)),
                pl.BlockSpec((N, 1), lambda i: (0, 0)),
            ],
            out_specs=(pl.BlockSpec((N, 1), lambda i: (0, 0)),
                       pl.BlockSpec((1, 1), lambda i: (0, 0))),
        ),
    )(pooled, w, b, t)


# ----------------------------------------------------------------------------
# XLA glue: stem im2col, 1x1 conv wrapper
# ----------------------------------------------------------------------------
def _stem_patches(x):
    # x: (N, H, W, 3) f32 -> (N*OH*OW, 3*49) bf16 patches for 7x7 stride-2 pad-3
    N, H, W, C = x.shape
    x = jnp.pad(x, ((0, 0), (3, 3), (3, 3), (0, 0)))
    Hp, Wp = H + 6, W + 6
    OH = (Hp - 7) // 2 + 1
    OW = (Wp - 7) // 2 + 1
    cols = []
    for i in range(7):
        for j in range(7):
            cols.append(x[:, i:i + 2 * OH:2, j:j + 2 * OW:2, :])
    p = jnp.stack(cols, axis=-1)                 # (N, OH, OW, C, 49)
    p = p.reshape(N * OH * OW, C * 49)
    return p.astype(jnp.bfloat16), OH, OW


def stem_conv(x, wm, scale, bias):
    N = x.shape[0]
    patches, OH, OW = _stem_patches(x)
    K, Cout = wm.shape
    if patches.shape[1] != K:
        patches = jnp.pad(patches, ((0, 0), (0, K - patches.shape[1])))
    y = matmul_scale_bias(patches, wm, scale, bias, act=True)
    return y.reshape(N, OH, OW, Cout)


def conv1x1_bn(x, wm, scale, bias, act, stride=1):
    # x: (N, H, W, Cin) bf16; wm: (Cin_eff, Cout) bf16 (Cin_eff >= Cin, zero rows)
    if stride > 1:
        x = x[:, ::stride, ::stride, :]
    N, H, W, Cin = x.shape
    a = x.reshape(N * H * W, Cin)
    if wm.shape[0] != Cin:
        a = jnp.pad(a, ((0, 0), (0, wm.shape[0] - Cin)))
    y = matmul_scale_bias(a, wm, scale, bias, act=act)
    return y.reshape(N, H, W, wm.shape[1])


# ----------------------------------------------------------------------------
# Deterministic synthetic parameters (exact se_resnext50_32x4d shapes), packed
# into kernel-ready layouts at init (bf16 matmul weights, per-tap block-diagonal
# super-group weights, folded BN scale/bias).
# ----------------------------------------------------------------------------
class ParamGen:
    def __init__(self, seed):
        self.key = jax.random.PRNGKey(seed)

    def next(self):
        self.key, sub = jax.random.split(self.key)
        return sub


def conv_params(pg, cout, cin, kh, kw):
    fan_in = cin * kh * kw
    return jax.random.normal(pg.next(), (cout, cin, kh, kw), jnp.float32) * jnp.sqrt(2.0 / fan_in)


def _fold_bn(pg, c):
    gamma = 1.0 + 0.1 * jax.random.normal(pg.next(), (c,), jnp.float32)
    beta = 0.1 * jax.random.normal(pg.next(), (c,), jnp.float32)
    mean = 0.1 * jax.random.normal(pg.next(), (c,), jnp.float32)
    var = 1.0 + 0.1 * jax.random.uniform(pg.next(), (c,), jnp.float32)
    scale = gamma / jnp.sqrt(var + BN_EPS)
    bias = beta - mean * scale
    return scale.reshape(1, c), bias.reshape(1, c)


def _pack_1x1(w, cin_eff=None):
    cout, cin = w.shape[0], w.shape[1]
    wm = w.reshape(cout, cin).T
    if cin_eff is not None and cin_eff != cin:
        wm = jnp.pad(wm, ((0, cin_eff - cin), (0, 0)))
    return wm.astype(jnp.bfloat16)


def _pack_grouped(w, groups):
    # w: (Cout, cg, 3, 3) -> (nSG, 9, SG*cg, SG*og) bf16 block-diagonal per tap
    cout, cg = w.shape[0], w.shape[1]
    og = cout // groups
    SG = max(1, 128 // og)
    nSG = groups // SG
    wg = w.reshape(groups, og, cg, 3, 3)
    wg = jnp.transpose(wg, (0, 3, 4, 2, 1)).reshape(nSG, SG, 9, cg, og)
    eye = jnp.eye(SG, dtype=wg.dtype)
    B = jnp.einsum('sjtkn,jl->stjkln', wg, eye)
    return B.reshape(nSG, 9, SG * cg, SG * og).astype(jnp.bfloat16)


def _pack_stem(w):
    # (64, 3, 7, 7) -> (160, 128) bf16: K padded 147->160, Cout padded 64->128
    wm = w.reshape(64, 147).T
    wm = jnp.pad(wm, ((0, 13), (0, 64)))
    return wm.astype(jnp.bfloat16)


def make_block_params(pg, inplanes, planes, groups, reduction, stride, has_ds, cin_eff=None):
    width = (planes * 4 // 64) * groups      # base_width=4
    outp = planes * 4
    cin_eff = cin_eff if cin_eff is not None else inplanes
    p = {'stride': stride}
    p['w1'] = _pack_1x1(conv_params(pg, width, inplanes, 1, 1), cin_eff)
    p['sb1'] = _fold_bn(pg, width)
    p['w2'] = _pack_grouped(conv_params(pg, width, width // groups, 3, 3), groups)
    p['sb2'] = _fold_bn(pg, width)
    p['w3'] = _pack_1x1(conv_params(pg, outp, width, 1, 1))
    p['sb3'] = _fold_bn(pg, outp)
    cr = outp // reduction
    p['se_w1'] = jax.random.normal(pg.next(), (outp, cr), jnp.float32) * jnp.sqrt(1.0 / outp)
    p['se_b1'] = jnp.zeros((1, cr), jnp.float32)
    p['se_w2'] = jax.random.normal(pg.next(), (cr, outp), jnp.float32) * jnp.sqrt(1.0 / cr)
    p['se_b2'] = jnp.zeros((1, outp), jnp.float32)
    if has_ds:
        p['ds_w'] = _pack_1x1(conv_params(pg, outp, inplanes, 1, 1), cin_eff)
        p['ds_sb'] = _fold_bn(pg, outp)
    else:
        p['ds_w'] = None
    return p


def make_layer_params(pg, blocks, inplanes, planes, stride, cin_eff=None):
    groups, reduction = 32, 16
    params = [make_block_params(pg, inplanes, planes, groups, reduction, stride, True, cin_eff)]
    inplanes = planes * 4
    for _ in range(blocks - 1):
        params.append(make_block_params(pg, inplanes, planes, groups, reduction, 1, False))
    return params, inplanes


def init_params(seed=42):
    pg = ParamGen(seed)
    P = {'stem_w': _pack_stem(conv_params(pg, 64, 3, 7, 7))}
    s, b = _fold_bn(pg, 64)
    P['stem_sb'] = (jnp.pad(s, ((0, 0), (0, 64))), jnp.pad(b, ((0, 0), (0, 64))))
    inplanes = 64
    P['layer1'], inplanes = make_layer_params(pg, 3, inplanes, 64, 1, cin_eff=128)
    P['layer2'], inplanes = make_layer_params(pg, 4, inplanes, 128, 2)
    P['layer3'], inplanes = make_layer_params(pg, 6, inplanes, 256, 2)
    P['layer4'], inplanes = make_layer_params(pg, 3, inplanes, 512, 2)
    P['out_w'] = jax.random.normal(pg.next(), (2048, 1), jnp.float32) * jnp.sqrt(1.0 / 2048)
    P['out_b'] = jnp.zeros((1, 1), jnp.float32)
    return P


# ----------------------------------------------------------------------------
# Forward pass (NHWC + bf16 internally; NCHW f32 at the module boundary)
# ----------------------------------------------------------------------------
def block_forward(x, p):
    stride = p['stride']
    N, H, W, _ = x.shape
    out = conv1x1_bn(x, p['w1'], *p['sb1'], act=True)               # (N,H,W,width)
    # grouped 3x3 conv, implicit GEMM
    OH = (H - 1) // stride + 1
    OW = (W - 1) // stride + 1
    xp = jnp.pad(out, ((0, 0), (1, 1), (1, 1), (0, 0)))
    canvas, wq, mw = build_tap_canvas(xp, 3, stride, OH, OW)
    wide = gconv_matmul(canvas, p['w2'], p['sb2'][0], p['sb2'][1],
                        stride=stride, wq=wq, mw=mw, act=True)
    out = _dewiden(wide, OH, OW, wq)                                # (N,OH,OW,width)
    # conv3 (1x1) + folded BN + fused SE average pool
    HW = OH * OW
    out3, pooled = matmul_scale_bias_pool(out.reshape(N, HW, -1), p['w3'],
                                          p['sb3'][0], p['sb3'][1])
    if p['ds_w'] is not None:
        res = conv1x1_bn(x, p['ds_w'], *p['ds_sb'], act=False, stride=stride)
        res = res.reshape(N, HW, -1)
    else:
        res = x.reshape(N, HW, -1)
    gate = se_fc(pooled, p['se_w1'], p['se_b1'], p['se_w2'], p['se_b2'])
    y = scale_residual_relu(out3, res, gate)
    return y.reshape(N, OH, OW, -1)


def se_resnext50_forward(params, image, targets):
    # image: (N, 3, H, W) NCHW float32 (PyTorch layout); targets: (N,)
    x = jnp.transpose(image, (0, 2, 3, 1))                          # -> NHWC once
    x = stem_conv(x, params['stem_w'], *params['stem_sb'])          # (N,H/2,W/2,128)
    # MaxPool2d(3, stride=2, ceil_mode=True) via tap canvas (inputs are >=0 post-ReLU)
    N, H, W, C = x.shape
    OH = -(-(H - 3) // 2) + 1
    OW = -(-(W - 3) // 2) + 1
    canvas, wq, mw = build_tap_canvas(x, 3, 2, OH, OW)
    x = _dewiden(maxpool_taps(canvas, stride=2, wq=wq, mw=mw), OH, OW, wq)
    for layer in ('layer1', 'layer2', 'layer3', 'layer4'):
        for bp in params[layer]:
            x = block_forward(x, bp)
    N, H, W, C = x.shape
    pooled = global_avg_pool(x.reshape(N, H * W, C))                # adaptive_avg_pool2d
    t = targets.reshape(N, 1).astype(jnp.float32)
    logits, loss = head(pooled, params['out_w'], params['out_b'], t)
    return logits, loss[0, 0]


if __name__ == "__main__":
    key = jax.random.PRNGKey(0)
    k_img, k_tgt = jax.random.split(key)
    image = jax.random.normal(k_img, (2, 3, 32, 32), jnp.float32)   # NCHW, like PyTorch
    targets = (jax.random.uniform(k_tgt, (2,)) > 0.5).astype(jnp.float32)

    params = init_params(seed=42)
    logits, loss = se_resnext50_forward(params, image, targets)
    jax.block_until_ready((logits, loss))

    assert logits.shape == (2, 1)
    assert jnp.isfinite(loss)
    print("KERNEL_OK")
</pallas_src>

<mosaic_0001>
module attributes {stable_mosaic.version = 11 : i64} {
  func.func @_mm_kernel(%arg0: i32, %arg1: i32, %arg2: i32, %arg3: memref<512x160xbf16, #tpu.memory_space<vmem>>, %arg4: memref<160x128xbf16, #tpu.memory_space<vmem>>, %arg5: memref<1x128xf32, #tpu.memory_space<vmem>>, %arg6: memref<1x128xf32, #tpu.memory_space<vmem>>, %arg7: memref<512x128xbf16, #tpu.memory_space<vmem>>, %arg8: memref<512x128xf32, #tpu.memory_space<vmem>>) attributes {dimension_semantics = [#tpu.dimension_semantics<parallel>, #tpu.dimension_semantics<parallel>, #tpu.dimension_semantics<arbitrary>], iteration_bounds = array<i64: 1, 1, 1>, scalar_prefetch = 0 : i64, scratch_operands = 1 : i64, tpu.core_type = #tpu.core_type<tc>, window_params = [{transform_indices = @transform_0, window_bounds = array<i64: 512, 160>}, {transform_indices = @transform_1, window_bounds = array<i64: 160, 128>}, {transform_indices = @transform_2, window_bounds = array<i64: 1, 128>}, {transform_indices = @transform_3, window_bounds = array<i64: 1, 128>}, {transform_indices = @transform_4, window_bounds = array<i64: 512, 128>}]} {
    %c0_i32 = arith.constant 0 : i32
    %0 = arith.cmpi eq, %arg2, %c0_i32 : i32
    %1 = arith.extui %0 : i1 to i32
    %c0_i32_0 = arith.constant 0 : i32
    %2 = arith.cmpi ne, %1, %c0_i32_0 : i32
    scf.if %2 {
      %cst_10 = arith.constant 0.000000e+00 : f32
      %12 = vector.broadcast %cst_10 : f32 to vector<512x128xf32>
      %c0_11 = arith.constant 0 : index
      %c0_12 = arith.constant 0 : index
      %13 = vector.load %arg8[%c0_11, %c0_12] : memref<512x128xf32, #tpu.memory_space<vmem>>, vector<512x128xf32>
      tpu.vector_store %arg8[%c0_11, %c0_12], %12 {strides = array<i32>} : memref<512x128xf32, #tpu.memory_space<vmem>>, vector<512x128xf32>,
    } else {
    }
    %c0 = arith.constant 0 : index
    %c0_1 = arith.constant 0 : index
    %3 = vector.load %arg8[%c0, %c0_1] : memref<512x128xf32, #tpu.memory_space<vmem>>, vector<512x128xf32>
    %c0_2 = arith.constant 0 : index
    %c0_3 = arith.constant 0 : index
    %4 = vector.load %arg3[%c0_2, %c0_3] : memref<512x160xbf16, #tpu.memory_space<vmem>>, vector<512x160xbf16>
    %c0_4 = arith.constant 0 : index
    %c0_5 = arith.constant 0 : index
    %5 = vector.load %arg4[%c0_4, %c0_5] : memref<160x128xbf16, #tpu.memory_space<vmem>>, vector<160x128xbf16>
    %cst = arith.constant dense<0.000000e+00> : vector<512x128xf32>
    %6 = tpu.matmul %4, %5, %cst {dimension_numbers = #tpu.dot_dimension_numbers<[1], [0], [0], [1], [0, 0, 1, 1], [], []>} : vector<512x160xbf16>, vector<160x128xbf16>, vector<512x128xf32> -> vector<512x128xf32>
    %7 = arith.addf %3, %6 : vector<512x128xf32>
    %c0_6 = arith.constant 0 : index
    %c0_7 = arith.constant 0 : index
    %8 = vector.load %arg8[%c0_6, %c0_7] : memref<512x128xf32, #tpu.memory_space<vmem>>, vector<512x128xf32>
    tpu.vector_store %arg8[%c0_6, %c0_7], %7 {strides = array<i32>} : memref<512x128xf32, #tpu.memory_space<vmem>>, vector<512x128xf32>,
    %c0_i32_8 = arith.constant 0 : i32
    %9 = arith.cmpi eq, %arg2, %c0_i32_8 : i32
    %10 = arith.extui %9 : i1 to i32
    %c0_i32_9 = arith.constant 0 : i32
    %11 = arith.cmpi ne, %10, %c0_i32_9 : i32
    scf.if %11 {
      %c0_10 = arith.constant 0 : index
      %c0_11 = arith.constant 0 : index
      %12 = vector.load %arg8[%c0_10, %c0_11] : memref<512x128xf32, #tpu.memory_space<vmem>>, vector<512x128xf32>
      %c0_12 = arith.constant 0 : index
      %c0_13 = arith.constant 0 : index
      %13 = vector.load %arg5[%c0_12, %c0_13] : memref<1x128xf32, #tpu.memory_space<vmem>>, vector<1x128xf32>
      %14 = vector.broadcast %13 : vector<1x128xf32> to vector<512x128xf32>
      %15 = arith.mulf %12, %14 : vector<512x128xf32>
      %c0_14 = arith.constant 0 : index
      %c0_15 = arith.constant 0 : index
      %16 = vector.load %arg6[%c0_14, %c0_15] : memref<1x128xf32, #tpu.memory_space<vmem>>, vector<1x128xf32>
      %17 = vector.broadcast %16 : vector<1x128xf32> to vector<512x128xf32>
      %18 = arith.addf %15, %17 : vector<512x128xf32>
      %cst_16 = arith.constant 0.000000e+00 : f32
      %19 = vector.broadcast %cst_16 : f32 to vector<512x128xf32>
      %20 = arith.maximumf %18, %19 : vector<512x128xf32>
      %21 = arith.truncf %20 : vector<512x128xf32> to vector<512x128xbf16>
      %c0_17 = arith.constant 0 : index
      %c0_18 = arith.constant 0 : index
      %22 = vector.load %arg7[%c0_17, %c0_18] : memref<512x128xbf16, #tpu.memory_space<vmem>>, vector<512x128xbf16>
      tpu.vector_store %arg7[%c0_17, %c0_18], %21 {strides = array<i32>} : memref<512x128xbf16, #tpu.memory_space<vmem>>, vector<512x128xbf16>,
    } else {
    }
    return
  }
  func.func @transform_0(%arg0: i32, %arg1: i32, %arg2: i32) -> (i32, i32) {
    %c0_i32 = arith.constant 0 : i32
    return %arg0, %arg2 : i32, i32
  }
  func.func @transform_1(%arg0: i32, %arg1: i32, %arg2: i32) -> (i32, i32) {
    %c0_i32 = arith.constant 0 : i32
    return %arg2, %arg1 : i32, i32
  }
  func.func @transform_2(%arg0: i32, %arg1: i32, %arg2: i32) -> (i32, i32) {
    %c0_i32 = arith.constant 0 : i32
    %c0_i32_0 = arith.constant 0 : i32
    return %c0_i32, %arg1 : i32, i32
  }
  func.func @transform_3(%arg0: i32, %arg1: i32, %arg2: i32) -> (i32, i32) {
    %c0_i32 = arith.constant 0 : i32
    %c0_i32_0 = arith.constant 0 : i32
    return %c0_i32, %arg1 : i32, i32
  }
  func.func @transform_4(%arg0: i32, %arg1: i32, %arg2: i32) -> (i32, i32) {
    %c0_i32 = arith.constant 0 : i32
    return %arg0, %arg1 : i32, i32
  }
}

</mosaic_0001>

<llo_original>
// kernel: matmul_scale_bias.1
$region0: #{matmul_scale_bias.1}
  #allocation0 [shape = 'u32[]', space=smem, size = 0x4, offset = 0x4, fixed_abs, tag = 'smem constant byte address 0x4 - core index']
  #allocation1 [shape = 'u32[144,128]{1,0:T(1,128)}', space=vmem, size = 0x12000, scoped, tag = 'internal scratch']
  #allocation2 [shape = 'f32[512,128]{1,0:T(8,128)}', space=vmem, size = 0x40000, scoped, tag = 'scratch operand']
  %s0 = inlined_call_operand.vmem [shape: bf16[512,160], index: 0, kind: input, shape index: {}]
  %s1 = inlined_call_operand.vmem [shape: bf16[160,128], index: 1, kind: input, shape index: {}]
  %s2 = inlined_call_operand.vmem [shape: f32[1,128], index: 2, kind: input, shape index: {}]
  %s3 = inlined_call_operand.vmem [shape: f32[1,128], index: 3, kind: input, shape index: {}]
  %s4 = inlined_call_operand.hbm [shape: bf16[512,128], index: 4, kind: output, shape index: {}]
  %s5 = sld [smem:[#allocation0]]
  $region34: #{matmul_scale_bias.1} parent=0
    _
  %s7 = ssub.s32 1, %s5
  %s8 = scalar_select 0, %s7, %s5
  $region1: #{matmul_scale_bias.1} parent=0
    #allocation3 [shape = 'u8[131072]{0}', space=vmem, size = 0x20000, scoped, tag = 'output window, operand 0, single buffered']
    #allocation4 [shape = 's32[1]{0}', space=sflag, size = 0x4, scoped, tag = 'scoped memory for matmul_scale_bias.1']
    %9 = vsyncpa [#allocation4], 0
    // Predicated region
    $region2: #{matmul_scale_bias.1} parent=1 // pred_check
      _
    $region3: #{matmul_scale_bias.1} parent=1 // pred_check_branch
      %11 = sbr.rel (0) target = $region5
    $region4: #{matmul_scale_bias.1} parent=1 // pred_region
      _
    $region5: #{matmul_scale_bias.1} parent=1 // pred_fallthru
      _
    // Predicated region
    $region6: #{matmul_scale_bias.1} parent=1 // pred_check
      _
    $region7: #{matmul_scale_bias.1} parent=1 // pred_check_branch
      %13 = sbr.rel (0) target = $region9
    $region8: #{matmul_scale_bias.1} parent=1 // pred_region
      _
    $region9: #{matmul_scale_bias.1} parent=1 // pred_fallthru
      _
    // Predicated region
    $region10: #{matmul_scale_bias.1} parent=1 // pred_check
      _
    $region11: #{matmul_scale_bias.1} parent=1 // pred_check_branch
      %15 = sbr.rel (0) target = $region13
    $region12: #{matmul_scale_bias.1} parent=1 // pred_region
      _
    $region13: #{matmul_scale_bias.1} parent=1 // pred_fallthru
      _
    // Predicated region
    $region14: #{matmul_scale_bias.1} parent=1 // pred_check
      _
    $region15: #{matmul_scale_bias.1} parent=1 // pred_check_branch
      %17 = sbr.rel (0) target = $region17
    $region16: #{matmul_scale_bias.1} parent=1 // pred_region
      _
    $region17: #{matmul_scale_bias.1} parent=1 // pred_fallthru
      _
    %p19 = scmp.eq.s32.totalorder 0, 0
    // Predicated region
    $region18: #{matmul_scale_bias.1} parent=1 // pred_check
      %p20 = pneg %p19
    $region19: #{matmul_scale_bias.1} parent=1 // pred_check_branch
      %22 = sbr.rel (%p20) target = $region21
    $region20: #{matmul_scale_bias.1} parent=1 // pred_region
      %23 = vst [vmem:[#allocation2] sm:$0xff] 0.0
      %24 = vst [vmem:[#allocation2 + $0x8] sm:$0xff] 0.0
      %25 = vst [vmem:[#allocation2 + $0x10] sm:$0xff] 0.0
      %26 = vst [vmem:[#allocation2 + $0x18] sm:$0xff] 0.0
      %27 = vst [vmem:[#allocation2 + $0x20] sm:$0xff] 0.0
      %28 = vst [vmem:[#allocation2 + $0x28] sm:$0xff] 0.0
      %29 = vst [vmem:[#allocation2 + $0x30] sm:$0xff] 0.0
      %30 = vst [vmem:[#allocation2 + $0x38] sm:$0xff] 0.0
      %31 = vst [vmem:[#allocation2 + $0x40] sm:$0xff] 0.0
      %32 = vst [vmem:[#allocation2 + $0x48] sm:$0xff] 0.0
      %33 = vst [vmem:[#allocation2 + $0x50] sm:$0xff] 0.0
      %34 = vst [vmem:[#allocation2 + $0x58] sm:$0xff] 0.0
      %35 = vst [vmem:[#allocation2 + $0x60] sm:$0xff] 0.0
      %36 = vst [vmem:[#allocation2 + $0x68] sm:$0xff] 0.0
      %37 = vst [vmem:[#allocation2 + $0x70] sm:$0xff] 0.0
      %38 = vst [vmem:[#allocation2 + $0x78] sm:$0xff] 0.0
      %39 = vst [vmem:[#allocation2 + $0x80] sm:$0xff] 0.0
      %40 = vst [vmem:[#allocation2 + $0x88] sm:$0xff] 0.0
      %41 = vst [vmem:[#allocation2 + $0x90] sm:$0xff] 0.0
      %42 = vst [vmem:[#allocation2 + $0x98] sm:$0xff] 0.0
      %43 = vst [vmem:[#allocation2 + $0xa0] sm:$0xff] 0.0
      %44 = vst [vmem:[#allocation2 + $0xa8] sm:$0xff] 0.0
      %45 = vst [vmem:[#allocation2 + $0xb0] sm:$0xff] 0.0
      %46 = vst [vmem:[#allocation2 + $0xb8] sm:$0xff] 0.0
      %47 = vst [vmem:[#allocation2 + $0xc0] sm:$0xff] 0.0
      %48 = vst [vmem:[#allocation2 + $0xc8] sm:$0xff] 0.0
      %49 = vst [vmem:[#allocation2 + $0xd0] sm:$0xff] 0.0
      %50 = vst [vmem:[#allocation2 + $0xd8] sm:$0xff] 0.0
      %51 = vst [vmem:[#allocation2 + $0xe0] sm:$0xff] 0.0
      %52 = vst [vmem:[#allocation2 + $0xe8] sm:$0xff] 0.0
      %53 = vst [vmem:[#allocation2 + $0xf0] sm:$0xff] 0.0
      %54 = vst [vmem:[#allocation2 + $0xf8] sm:$0xff] 0.0
      %55 = vst [vmem:[#allocation2 + $0x100] sm:$0xff] 0.0
      %56 = vst [vmem:[#allocation2 + $0x108] sm:$0xff] 0.0
      %57 = vst [vmem:[#allocation2 + $0x110] sm:$0xff] 0.0
      %58 = vst [vmem:[#allocation2 + $0x118] sm:$0xff] 0.0
      %59 = vst [vmem:[#allocation2 + $0x120] sm:$0xff] 0.0
      %60 = vst [vmem:[#allocation2 + $0x128] sm:$0xff] 0.0
      %61 = vst [vmem:[#allocation2 + $0x130] sm:$0xff] 0.0
      %62 = vst [vmem:[#allocation2 + $0x138] sm:$0xff] 0.0
      %63 = vst [vmem:[#allocation2 + $0x140] sm:$0xff] 0.0
      %64 = vst [vmem:[#allocation2 + $0x148] sm:$0xff] 0.0
      %65 = vst [vmem:[#allocation2 + $0x150] sm:$0xff] 0.0
      %66 = vst [vmem:[#allocation2 + $0x158] sm:$0xff] 0.0
      %67 = vst [vmem:[#allocation2 + $0x160] sm:$0xff] 0.0
      %68 = vst [vmem:[#allocation2 + $0x168] sm:$0xff] 0.0
      %69 = vst [vmem:[#allocation2 + $0x170] sm:$0xff] 0.0
      %70 = vst [vmem:[#allocation2 + $0x178] sm:$0xff] 0.0
      %71 = vst [vmem:[#allocation2 + $0x180] sm:$0xff] 0.0
      %72 = vst [vmem:[#allocation2 + $0x188] sm:$0xff] 0.0
      %73 = vst [vmem:[#allocation2 + $0x190] sm:$0xff] 0.0
      %74 = vst [vmem:[#allocation2 + $0x198] sm:$0xff] 0.0
      %75 = vst [vmem:[#allocation2 + $0x1a0] sm:$0xff] 0.0
      %76 = vst [vmem:[#allocation2 + $0x1a8] sm:$0xff] 0.0
      %77 = vst [vmem:[#allocation2 + $0x1b0] sm:$0xff] 0.0
      %78 = vst [vmem:[#allocation2 + $0x1b8] sm:$0xff] 0.0
      %79 = vst [vmem:[#allocation2 + $0x1c0] sm:$0xff] 0.0
      %80 = vst [vmem:[#allocation2 + $0x1c8] sm:$0xff] 0.0
      %81 = vst [vmem:[#allocation2 + $0x1d0] sm:$0xff] 0.0
      %82 = vst [vmem:[#allocation2 + $0x1d8] sm:$0xff] 0.0
      %83 = vst [vmem:[#allocation2 + $0x1e0] sm:$0xff] 0.0
      %84 = vst [vmem:[#allocation2 + $0x1e8] sm:$0xff] 0.0
      %85 = vst [vmem:[#allocation2 + $0x1f0] sm:$0xff] 0.0
      %86 = vst [vmem:[#allocation2 + $0x1f8] sm:$0xff] 0.0
    $region21: #{matmul_scale_bias.1} parent=1 // pred_fallthru
      _
    %v87 = vld [vmem:[#allocation2] sm:$0xff]
    %v88 = vld [vmem:[#allocation2 + $0x8] sm:$0xff]
    %v89 = vld [vmem:[#allocation2 + $0x10] sm:$0xff]
    %v90 = vld [vmem:[#allocation2 + $0x18] sm:$0xff]
    %v91 = vld [vmem:[#allocation2 + $0x20] sm:$0xff]
    %v92 = vld [vmem:[#allocation2 + $0x28] sm:$0xff]
    %v93 = vld [vmem:[#allocation2 + $0x30] sm:$0xff]
    %v94 = vld [vmem:[#allocation2 + $0x38] sm:$0xff]
    %v95 = vld [vmem:[#allocation2 + $0x40] sm:$0xff]
    %v96 = vld [vmem:[#allocation2 + $0x48] sm:$0xff]
    %v97 = vld [vmem:[#allocation2 + $0x50] sm:$0xff]
    %v98 = vld [vmem:[#allocation2 + $0x58] sm:$0xff]
    %v99 = vld [vmem:[#allocation2 + $0x60] sm:$0xff]
    %v100 = vld [vmem:[#allocation2 + $0x68] sm:$0xff]
    %v101 = vld [vmem:[#allocation2 + $0x70] sm:$0xff]
    %v102 = vld [vmem:[#allocation2 + $0x78] sm:$0xff]
    %v103 = vld [vmem:[#allocation2 + $0x80] sm:$0xff]
    %v104 = vld [vmem:[#allocation2 + $0x88] sm:$0xff]
    %v105 = vld [vmem:[#allocation2 + $0x90] sm:$0xff]
    %v106 = vld [vmem:[#allocation2 + $0x98] sm:$0xff]
    %v107 = vld [vmem:[#allocation2 + $0xa0] sm:$0xff]
    %v108 = vld [vmem:[#allocation2 + $0xa8] sm:$0xff]
    %v109 = vld [vmem:[#allocation2 + $0xb0] sm:$0xff]
    %v110 = vld [vmem:[#allocation2 + $0xb8] sm:$0xff]
    %v111 = vld [vmem:[#allocation2 + $0xc0] sm:$0xff]
    %v112 = vld [vmem:[#allocation2 + $0xc8] sm:$0xff]
    %v113 = vld [vmem:[#allocation2 + $0xd0] sm:$0xff]
    %v114 = vld [vmem:[#allocation2 + $0xd8] sm:$0xff]
    %v115 = vld [vmem:[#allocation2 + $0xe0] sm:$0xff]
    %v116 = vld [vmem:[#allocation2 + $0xe8] sm:$0xff]
    %v117 = vld [vmem:[#allocation2 + $0xf0] sm:$0xff]
    %v118 = vld [vmem:[#allocation2 + $0xf8] sm:$0xff]
    %v119 = vld [vmem:[#allocation2 + $0x100] sm:$0xff]
    %v120 = vld [vmem:[#allocation2 + $0x108] sm:$0xff]
    %v121 = vld [vmem:[#allocation2 + $0x110] sm:$0xff]
    %v122 = vld [vmem:[#allocation2 + $0x118] sm:$0xff]
    %v123 = vld [vmem:[#allocation2 + $0x120] sm:$0xff]
    %v124 = vld [vmem:[#allocation2 + $0x128] sm:$0xff]
    %v125 = vld [vmem:[#allocation2 + $0x130] sm:$0xff]
    %v126 = vld [vmem:[#allocation2 + $0x138] sm:$0xff]
    %v127 = vld [vmem:[#allocation2 + $0x140] sm:$0xff]
    %v128 = vld [vmem:[#allocation2 + $0x148] sm:$0xff]
    %v129 = vld [vmem:[#allocation2 + $0x150] sm:$0xff]
    %v130 = vld [vmem:[#allocation2 + $0x158] sm:$0xff]
    %v131 = vld [vmem:[#allocation2 + $0x160] sm:$0xff]
    %v132 = vld [vmem:[#allocation2 + $0x168] sm:$0xff]
    %v133 = vld [vmem:[#allocation2 + $0x170] sm:$0xff]
    %v134 = vld [vmem:[#allocation2 + $0x178] sm:$0xff]
    %v135 = vld [vmem:[#allocation2 + $0x180] sm:$0xff]
    %v136 = vld [vmem:[#allocation2 + $0x188] sm:$0xff]
    %v137 = vld [vmem:[#allocation2 + $0x190] sm:$0xff]
    %v138 = vld [vmem:[#allocation2 + $0x198] sm:$0xff]
    %v139 = vld [vmem:[#allocation2 + $0x1a0] sm:$0xff]
    %v140 = vld [vmem:[#allocation2 + $0x1a8] sm:$0xff]
    %v141 = vld [vmem:[#allocation2 + $0x1b0] sm:$0xff]
    %v142 = vld [vmem:[#allocation2 + $0x1b8] sm:$0xff]
    %v143 = vld [vmem:[#allocation2 + $0x1c0] sm:$0xff]
    %v144 = vld [vmem:[#allocation2 + $0x1c8] sm:$0xff]
    %v145 = vld [vmem:[#allocation2 + $0x1d0] sm:$0xff]
    %v146 = vld [vmem:[#allocation2 + $0x1d8] sm:$0xff]
    %v147 = vld [vmem:[#allocation2 + $0x1e0] sm:$0xff]
    %v148 = vld [vmem:[#allocation2 + $0x1e8] sm:$0xff]
    %v149 = vld [vmem:[#allocation2 + $0x1f0] sm:$0xff]
    %v150 = vld [vmem:[#allocation2 + $0x1f8] sm:$0xff]
    %v151 = vld [vmem:[%s0] sm:$0xff]
    %v152 = vld [vmem:[%s0 + $0x8] sm:$0xff]
    %v153 = vld [vmem:[%s0 + $0x10] sm:$0xff]
    %v154 = vld [vmem:[%s0 + $0x18] sm:$0xff]
    %v155 = vld [vmem:[%s0 + $0x20] sm:$0xff]
    %v156 = vld [vmem:[%s0 + $0x28] sm:$0xff]
    %v157 = vld [vmem:[%s0 + $0x30] sm:$0xff]
    %v158 = vld [vmem:[%s0 + $0x38] sm:$0xff]
    %v159 = vld [vmem:[%s0 + $0x40] sm:$0xff]
    %v160 = vld [vmem:[%s0 + $0x48] sm:$0xff]
    %v161 = vld [vmem:[%s0 + $0x50] sm:$0xff]
    %v162 = vld [vmem:[%s0 + $0x58] sm:$0xff]
    %v163 = vld [vmem:[%s0 + $0x60] sm:$0xff]
    %v164 = vld [vmem:[%s0 + $0x68] sm:$0xff]
    %v165 = vld [vmem:[%s0 + $0x70] sm:$0xff]
    %v166 = vld [vmem:[%s0 + $0x78] sm:$0xff]
    %v167 = vld [vmem:[%s0 + $0x80] sm:$0xff]
    %v168 = vld [vmem:[%s0 + $0x88] sm:$0xff]
    %v169 = vld [vmem:[%s0 + $0x90] sm:$0xff]
    %v170 = vld [vmem:[%s0 + $0x98] sm:$0xff]
    %v171 = vld [vmem:[%s0 + $0xa0] sm:$0xff]
    %v172 = vld [vmem:[%s0 + $0xa8] sm:$0xff]
    %v173 = vld [vmem:[%s0 + $0xb0] sm:$0xff]
    %v174 = vld [vmem:[%s0 + $0xb8] sm:$0xff]
    %v175 = vld [vmem:[%s0 + $0xc0] sm:$0xff]
    %v176 = vld [vmem:[%s0 + $0xc8] sm:$0xff]
    %v177 = vld [vmem:[%s0 + $0xd0] sm:$0xff]
    %v178 = vld [vmem:[%s0 + $0xd8] sm:$0xff]
    %v179 = vld [vmem:[%s0 + $0xe0] sm:$0xff]
    %v180 = vld [vmem:[%s0 + $0xe8] sm:$0xff]
    %v181 = vld [vmem:[%s0 + $0xf0] sm:$0xff]
    %v182 = vld [vmem:[%s0 + $0xf8] sm:$0xff]
    %v183 = vld [vmem:[%s0 + $0x100] sm:$0xff]
    %v184 = vld [vmem:[%s0 + $0x108] sm:$0xff]
    %v185 = vld [vmem:[%s0 + $0x110] sm:$0xff]
    %v186 = vld [vmem:[%s0 + $0x118] sm:$0xff]
    %v187 = vld [vmem:[%s0 + $0x120] sm:$0xff]
    %v188 = vld [vmem:[%s0 + $0x128] sm:$0xff]
    %v189 = vld [vmem:[%s0 + $0x130] sm:$0xff]
    %v190 = vld [vmem:[%s0 + $0x138] sm:$0xff]
    %v191 = vld [vmem:[%s0 + $0x140] sm:$0xff]
    %v192 = vld [vmem:[%s0 + $0x148] sm:$0xff]
    %v193 = vld [vmem:[%s0 + $0x150] sm:$0xff]
    %v194 = vld [vmem:[%s0 + $0x158] sm:$0xff]
    %v195 = vld [vmem:[%s0 + $0x160] sm:$0xff]
    %v196 = vld [vmem:[%s0 + $0x168] sm:$0xff]
    %v197 = vld [vmem:[%s0 + $0x170] sm:$0xff]
    %v198 = vld [vmem:[%s0 + $0x178] sm:$0xff]
    %v199 = vld [vmem:[%s0 + $0x180] sm:$0xff]
    %v200 = vld [vmem:[%s0 + $0x188] sm:$0xff]
    %v201 = vld [vmem:[%s0 + $0x190] sm:$0xff]
    %v202 = vld [vmem:[%s0 + $0x198] sm:$0xff]
    %v203 = vld [vmem:[%s0 + $0x1a0] sm:$0xff]
    %v204 = vld [vmem:[%s0 + $0x1a8] sm:$0xff]
    %v205 = vld [vmem:[%s0 + $0x1b0] sm:$0xff]
    %v206 = vld [vmem:[%s0 + $0x1b8] sm:$0xff]
    %v207 = vld [vmem:[%s0 + $0x1c0] sm:$0xff]
    %v208 = vld [vmem:[%s0 + $0x1c8] sm:$0xff]
    %v209 = vld [vmem:[%s0 + $0x1d0] sm:$0xff]
    %v210 = vld [vmem:[%s0 + $0x1d8] sm:$0xff]
    %v211 = vld [vmem:[%s0 + $0x1e0] sm:$0xff]
    %v212 = vld [vmem:[%s0 + $0x1e8] sm:$0xff]
    %v213 = vld [vmem:[%s0 + $0x1f0] sm:$0xff]
    %v214 = vld [vmem:[%s0 + $0x1f8] sm:$0xff]
    %v215 = vld [vmem:[%s1] sm:$0xf]
    %v216 = vld [vmem:[%s1 + $0x4] sm:$0xf]
    %v217 = vld [vmem:[%s1 + $0x8] sm:$0xf]
    %v218 = vld [vmem:[%s1 + $0xc] sm:$0xf]
    %v219 = vld [vmem:[%s1 + $0x10] sm:$0xf]
    %v220 = vld [vmem:[%s1 + $0x14] sm:$0xf]
    %v221 = vld [vmem:[%s1 + $0x18] sm:$0xf]
    %v222 = vld [vmem:[%s1 + $0x1c] sm:$0xf]
    %v223 = vld [vmem:[%s1 + $0x20] sm:$0xf]
    %v224 = vld [vmem:[%s1 + $0x24] sm:$0xf]
    %v225 = vld [vmem:[%s1 + $0x28] sm:$0xf]
    %v226 = vld [vmem:[%s1 + $0x2c] sm:$0xf]
    %v227 = vld [vmem:[%s1 + $0x30] sm:$0xf]
    %v228 = vld [vmem:[%s1 + $0x34] sm:$0xf]
    %v229 = vld [vmem:[%s1 + $0x38] sm:$0xf]
    %v230 = vld [vmem:[%s1 + $0x3c] sm:$0xf]
    %v231 = vld [vmem:[%s1 + $0x40] sm:$0xf]
    %v232 = vld [vmem:[%s1 + $0x44] sm:$0xf]
    %v233 = vld [vmem:[%s1 + $0x48] sm:$0xf]
    %v234 = vld [vmem:[%s1 + $0x4c] sm:$0xf]
    %v299 = vunpack.c.l.b16 %v151
    %v300 = vunpack.c.h.b16 %v151
    %v301 = vunpack.c.l.b16 %v152
    %v302 = vunpack.c.h.b16 %v152
    %v303 = vunpack.c.l.b16 %v153
    %v304 = vunpack.c.h.b16 %v153
    %v305 = vunpack.c.l.b16 %v154
    %v306 = vunpack.c.h.b16 %v154
    %v307 = vunpack.c.l.b16 %v155
    %v308 = vunpack.c.h.b16 %v155
    %v309 = vunpack.c.l.b16 %v156
    %v310 = vunpack.c.h.b16 %v156
    %v311 = vunpack.c.l.b16 %v157
    %v312 = vunpack.c.h.b16 %v157
    %v313 = vunpack.c.l.b16 %v158
    %v314 = vunpack.c.h.b16 %v158
    %v315 = vunpack.c.l.b16 %v159
    %v316 = vunpack.c.h.b16 %v159
    %v317 = vunpack.c.l.b16 %v160
    %v318 = vunpack.c.h.b16 %v160
    %v319 = vunpack.c.l.b16 %v161
    %v320 = vunpack.c.h.b16 %v161
    %v321 = vunpack.c.l.b16 %v162
    %v322 = vunpack.c.h.b16 %v162
    %v323 = vunpack.c.l.b16 %v163
    %v324 = vunpack.c.h.b16 %v163
    %v325 = vunpack.c.l.b16 %v164
    %v326 = vunpack.c.h.b16 %v164
    %v327 = vunpack.c.l.b16 %v165
    %v328 = vunpack.c.h.b16 %v165
    %v329 = vunpack.c.l.b16 %v166
    %v330 = vunpack.c.h.b16 %v166
    %v331 = vunpack.c.l.b16 %v167
    %v332 = vunpack.c.h.b16 %v167
    %v333 = vunpack.c.l.b16 %v168
    %v334 = vunpack.c.h.b16 %v168
    %v335 = vunpack.c.l.b16 %v169
    %v336 = vunpack.c.h.b16 %v169
    %v337 = vunpack.c.l.b16 %v170
    %v338 = vunpack.c.h.b16 %v170
    %v339 = vunpack.c.l.b16 %v171
    %v340 = vunpack.c.h.b16 %v171
    %v341 = vunpack.c.l.b16 %v172
    %v342 = vunpack.c.h.b16 %v172
    %v343 = vunpack.c.l.b16 %v173
    %v344 = vunpack.c.h.b16 %v173
    %v345 = vunpack.c.l.b16 %v174
    %v346 = vunpack.c.h.b16 %v174
    %v347 = vunpack.c.l.b16 %v175
    %v348 = vunpack.c.h.b16 %v175
    %v349 = vunpack.c.l.b16 %v176
    %v350 = vunpack.c.h.b16 %v176
    %v351 = vunpack.c.l.b16 %v177
    %v352 = vunpack.c.h.b16 %v177
    %v353 = vunpack.c.l.b16 %v178
    %v354 = vunpack.c.h.b16 %v178
    %v355 = vunpack.c.l.b16 %v179
    %v356 = vunpack.c.h.b16 %v179
    %v357 = vunpack.c.l.b16 %v180
    %v358 = vunpack.c.h.b16 %v180
    %v359 = vunpack.c.l.b16 %v181
    %v360 = vunpack.c.h.b16 %v181
    %v361 = vunpack.c.l.b16 %v182
    %v362 = vunpack.c.h.b16 %v182
    %v363 = vunpack.c.l.b16 %v183
    %v364 = vunpack.c.h.b16 %v183
    %v365 = vunpack.c.l.b16 %v184
    %v366 = vunpack.c.h.b16 %v184
    %v367 = vunpack.c.l.b16 %v185
    %v368 = vunpack.c.h.b16 %v185
    %v369 = vunpack.c.l.b16 %v186
    %v370 = vunpack.c.h.b16 %v186
    %v371 = vunpack.c.l.b16 %v187
    %v372 = vunpack.c.h.b16 %v187
    %v373 = vunpack.c.l.b16 %v188
    %v374 = vunpack.c.h.b16 %v188
    %v375 = vunpack.c.l.b16 %v189
    %v376 = vunpack.c.h.b16 %v189
    %v377 = vunpack.c.l.b16 %v190
    %v378 = vunpack.c.h.b16 %v190
    %v379 = vunpack.c.l.b16 %v191
    %v380 = vunpack.c.h.b16 %v191
    %v381 = vunpack.c.l.b16 %v192
    %v382 = vunpack.c.h.b16 %v192
    %v383 = vunpack.c.l.b16 %v193
    %v384 = vunpack.c.h.b16 %v193
    %v385 = vunpack.c.l.b16 %v194
    %v386 = vunpack.c.h.b16 %v194
    %v387 = vunpack.c.l.b16 %v195
    %v388 = vunpack.c.h.b16 %v195
    %v389 = vunpack.c.l.b16 %v196
    %v390 = vunpack.c.h.b16 %v196
    %v391 = vunpack.c.l.b16 %v197
    %v392 = vunpack.c.h.b16 %v197
    %v393 = vunpack.c.l.b16 %v198
    %v394 = vunpack.c.h.b16 %v198
    %v395 = vunpack.c.l.b16 %v199
    %v396 = vunpack.c.h.b16 %v199
    %v397 = vunpack.c.l.b16 %v200
    %v398 = vunpack.c.h.b16 %v200
    %v399 = vunpack.c.l.b16 %v201
    %v400 = vunpack.c.h.b16 %v201
    %v401 = vunpack.c.l.b16 %v202
    %v402 = vunpack.c.h.b16 %v202
    %v403 = vunpack.c.l.b16 %v203
    %v404 = vunpack.c.h.b16 %v203
    %v405 = vunpack.c.l.b16 %v204
    %v406 = vunpack.c.h.b16 %v204
    %v407 = vunpack.c.l.b16 %v205
    %v408 = vunpack.c.h.b16 %v205
    %v409 = vunpack.c.l.b16 %v206
    %v410 = vunpack.c.h.b16 %v206
    %v411 = vunpack.c.l.b16 %v207
    %v412 = vunpack.c.h.b16 %v207
    %v413 = vunpack.c.l.b16 %v208
    %v414 = vunpack.c.h.b16 %v208
    %v415 = vunpack.c.l.b16 %v209
    %v416 = vunpack.c.h.b16 %v209
    %v417 = vunpack.c.l.b16 %v210
    %v418 = vunpack.c.h.b16 %v210
    %v419 = vunpack.c.l.b16 %v211
    %v420 = vunpack.c.h.b16 %v211
    %v421 = vunpack.c.l.b16 %v212
    %v422 = vunpack.c.h.b16 %v212
    %v423 = vunpack.c.l.b16 %v213
    %v424 = vunpack.c.h.b16 %v213
    %v425 = vunpack.c.l.b16 %v214
    %v426 = vunpack.c.h.b16 %v214
    %v427 = vpack.c.b16 %v301, %v299
    %v428 = vpack.c.b16 %v302, %v300
    %v429 = vpack.c.b16 %v305, %v303
    %v430 = vpack.c.b16 %v306, %v304
    %v431 = vpack.c.b16 %v309, %v307
    %v432 = vpack.c.b16 %v310, %v308
    %v433 = vpack.c.b16 %v313, %v311
    %v434 = vpack.c.b16 %v314, %v312
    %v435 = vpack.c.b16 %v317, %v315
    %v436 = vpack.c.b16 %v318, %v316
    %v437 = vpack.c.b16 %v321, %v319
    %v438 = vpack.c.b16 %v322, %v320
    %v439 = vpack.c.b16 %v325, %v323
    %v440 = vpack.c.b16 %v326, %v324
    %v441 = vpack.c.b16 %v329, %v327
    %v442 = vpack.c.b16 %v330, %v328
    %v443 = vpack.c.b16 %v333, %v331
    %v444 = vpack.c.b16 %v334, %v332
    %v445 = vpack.c.b16 %v337, %v335
    %v446 = vpack.c.b16 %v338, %v336
    %v447 = vpack.c.b16 %v341, %v339
    %v448 = vpack.c.b16 %v342, %v340
    %v449 = vpack.c.b16 %v345, %v343
    %v450 = vpack.c.b16 %v346, %v344
    %v451 = vpack.c.b16 %v349, %v347
    %v452 = vpack.c.b16 %v350, %v348
    %v453 = vpack.c.b16 %v353, %v351
    %v454 = vpack.c.b16 %v354, %v352
    %v455 = vpack.c.b16 %v357, %v355
    %v456 = vpack.c.b16 %v358, %v356
    %v457 = vpack.c.b16 %v361, %v359
    %v458 = vpack.c.b16 %v362, %v360
    %v459 = vpack.c.b16 %v365, %v363
    %v460 = vpack.c.b16 %v366, %v364
    %v461 = vpack.c.b16 %v369, %v367
    %v462 = vpack.c.b16 %v370, %v368
    %v463 = vpack.c.b16 %v373, %v371
    %v464 = vpack.c.b16 %v374, %v372
    %v465 = vpack.c.b16 %v377, %v375
    %v466 = vpack.c.b16 %v378, %v376
    %v467 = vpack.c.b16 %v381, %v379
    %v468 = vpack.c.b16 %v382, %v380
    %v469 = vpack.c.b16 %v385, %v383
    %v470 = vpack.c.b16 %v386, %v384
    %v471 = vpack.c.b16 %v389, %v387
    %v472 = vpack.c.b16 %v390, %v388
    %v473 = vpack.c.b16 %v393, %v391
    %v474 = vpack.c.b16 %v394, %v392
    %v475 = vpack.c.b16 %v397, %v395
    %v476 = vpack.c.b16 %v398, %v396
    %v477 = vpack.c.b16 %v401, %v399
    %v478 = vpack.c.b16 %v402, %v400
    %v479 = vpack.c.b16 %v405, %v403
    %v480 = vpack.c.b16 %v406, %v404
    %v481 = vpack.c.b16 %v409, %v407
    %v482 = vpack.c.b16 %v410, %v408
    %v483 = vpack.c.b16 %v413, %v411
    %v484 = vpack.c.b16 %v414, %v412
    %v485 = vpack.c.b16 %v417, %v415
    %v486 = vpack.c.b16 %v418, %v416
    %v487 = vpack.c.b16 %v421, %v419
    %v488 = vpack.c.b16 %v422, %v420
    %v489 = vpack.c.b16 %v425, %v423
    %v490 = vpack.c.b16 %v426, %v424
    %v543 = vunpack.c.l.b16 %v215
    %v544 = vunpack.c.l.b16 %v216
    %v545 = vunpack.c.l.b16 %v217
    %v546 = vunpack.c.l.b16 %v218
    %v547 = vunpack.c.l.b16 %v219
    %v548 = vunpack.c.l.b16 %v220
    %v549 = vunpack.c.l.b16 %v221
    %v550 = vunpack.c.l.b16 %v222
    %v551 = vunpack.c.l.b16 %v223
    %v552 = vunpack.c.l.b16 %v224
    %v553 = vunpack.c.l.b16 %v225
    %v554 = vunpack.c.l.b16 %v226
    %v555 = vunpack.c.l.b16 %v227
    %v556 = vunpack.c.l.b16 %v228
    %v557 = vunpack.c.l.b16 %v229
    %v558 = vunpack.c.l.b16 %v230
    %v559 = vunpack.c.l.b16 %v231
    %v560 = vunpack.c.l.b16 %v232
    %v561 = vunpack.c.l.b16 %v233
    %v562 = vunpack.c.l.b16 %v234
    %v563 = vpack.c.b16 %v544, %v543
    %v564 = vpack.c.b16 %v546, %v545
    %v565 = vpack.c.b16 %v548, %v547
    %v566 = vpack.c.b16 %v550, %v549
    %v567 = vpack.c.b16 %v552, %v551
    %v568 = vpack.c.b16 %v554, %v553
    %v569 = vpack.c.b16 %v556, %v555
    %v570 = vpack.c.b16 %v558, %v557
    %v571 = vpack.c.b16 %v560, %v559
    %v572 = vpack.c.b16 %v562, %v561
    %vm583 = vcmask 261120
    %v585 = vsel %vm583, %v428, 0
    %v588 = vsel %vm583, %v430, 0
    %v591 = vsel %vm583, %v432, 0
    %v594 = vsel %vm583, %v434, 0
    %v597 = vsel %vm583, %v436, 0
    %v600 = vsel %vm583, %v438, 0
    %v603 = vsel %vm583, %v440, 0
    %v606 = vsel %vm583, %v442, 0
    %v609 = vsel %vm583, %v444, 0
    %v612 = vsel %vm583, %v446, 0
    %v615 = vsel %vm583, %v448, 0
    %v618 = vsel %vm583, %v450, 0
    %v621 = vsel %vm583, %v452, 0
    %v624 = vsel %vm583, %v454, 0
    %v627 = vsel %vm583, %v456, 0
    %v630 = vsel %vm583, %v458, 0
    %v633 = vsel %vm583, %v460, 0
    %v636 = vsel %vm583, %v462, 0
    %v639 = vsel %vm583, %v464, 0
    %v642 = vsel %vm583, %v466, 0
    %v645 = vsel %vm583, %v468, 0
    %v648 = vsel %vm583, %v470, 0
    %v651 = vsel %vm583, %v472, 0
    %v654 = vsel %vm583, %v474, 0
    %v657 = vsel %vm583, %v476, 0
    %v660 = vsel %vm583, %v478, 0
    %v663 = vsel %vm583, %v480, 0
    %v666 = vsel %vm583, %v482, 0
    %v669 = vsel %vm583, %v484, 0
    %v672 = vsel %vm583, %v486, 0
    %v675 = vsel %vm583, %v488, 0
    %v678 = vsel %vm583, %v490, 0
    %680 = vmatprep.subr.bf16.mxu0 0
    %681 = vmatpush1.bf16.msra.mxu0 %v563
    %682 = vmatprep.subr.bf16.mxu0 0
    %683 = vmatpush1.bf16.msra.mxu0 %v564
    %684 = vmatprep.subr.bf16.mxu0 0
    %685 = vmatpush1.bf16.msra.mxu0 %v565
    %686 = vmatprep.subr.bf16.mxu0 0
    %687 = vmatpush1.bf16.msra.mxu0 %v566
    %688 = vmatprep.subr.bf16.mxu0 0
    %689 = vmatpush1.bf16.msra.mxu0 %v567
    %690 = vmatprep.subr.bf16.mxu0 0
    %691 = vmatpush1.bf16.msra.mxu0 %v568
    %692 = vmatprep.subr.bf16.mxu0 0
    %693 = vmatpush1.bf16.msra.mxu0 %v569
    %694 = vmatprep.subr.bf16.mxu0 0
    %695 = vmatpush1.bf16.msra.mxu0 %v570
    %696 = vmatprep.subr.bf16.mxu0 0
    %697 = vmatpush1.bf16.msra.mxu0 %v571
    %698 = vmatprep.subr.bf16.mxu0 0
    %699 = vmatpush1.bf16.msra.mxu0 %v572
    %700 = vmatprep.subr.bf16.mxu0 0
    %701 = vmatpush1.bf16.msra.mxu0 0
    %702 = vmatprep.subr.bf16.mxu0 0
    %703 = vmatpush1.bf16.msra.mxu0 0
    %704 = vmatprep.subr.bf16.mxu0 0
    %705 = vmatpush1.bf16.msra.mxu0 0
    %706 = vmatprep.subr.bf16.mxu0 0
    %707 = vmatpush1.bf16.msra.mxu0 0
    %708 = vmatprep.subr.bf16.mxu0 0
    %709 = vmatpush1.bf16.msra.mxu0 0
    %710 = vmatprep.subr.bf16.mxu0 0
    %711 = vmatpush1.bf16.msra.mxu0 0
    %712 = vmatprep.mubr.bf16.mxu0 %v585
    %713 = vmatmul.mubr.bf16.gmra.mrb[0].mxu0 %v427
    %v714 = vpop.f32.mrb[0].mxu0
    %v715 = vadd.f32 0.0, %v714
    %v716 = vpop.f32.mrb[0].mxu0
    %v717 = vpop.f32.mrb[0].mxu0
    %v718 = vadd.f32 0.0, %v717
    %v719 = vpop.f32.mrb[0].mxu0
    %720 = vmatprep.mubr.bf16.mxu0 %v588
    %721 = vmatmul.mubr.bf16.gmra.mrb[0].mxu0 %v429
    %v722 = vpop.f32.mrb[0].mxu0
    %v723 = vadd.f32 0.0, %v722
    %v724 = vpop.f32.mrb[0].mxu0
    %v725 = vpop.f32.mrb[0].mxu0
    %v726 = vadd.f32 0.0, %v725
    %v727 = vpop.f32.mrb[0].mxu0
    %728 = vmatprep.mubr.bf16.mxu0 %v591
    %729 = vmatmul.mubr.bf16.gmra.mrb[0].mxu0 %v431
    %v730 = vpop.f32.mrb[0].mxu0
    %v731 = vadd.f32 0.0, %v730
    %v732 = vpop.f32.mrb[0].mxu0
    %v733 = vpop.f32.mrb[0].mxu0
    %v734 = vadd.f32 0.0, %v733
    %v735 = vpop.f32.mrb[0].mxu0
    %736 = vmatprep.mubr.bf16.mxu0 %v594
    %737 = vmatmul.mubr.bf16.gmra.mrb[0].mxu0 %v433
    %v738 = vpop.f32.mrb[0].mxu0
    %v739 = vadd.f32 0.0, %v738
    %v740 = vpop.f32.mrb[0].mxu0
    %v741 = vpop.f32.mrb[0].mxu0
    %v742 = vadd.f32 0.0, %v741
    %v743 = vpop.f32.mrb[0].mxu0
    %744 = vmatprep.mubr.bf16.mxu0 %v597
    %745 = vmatmul.mubr.bf16.gmra.mrb[0].mxu0 %v435
    %v746 = vpop.f32.mrb[0].mxu0
    %v747 = vadd.f32 0.0, %v746
    %v748 = vpop.f32.mrb[0].mxu0
    %v749 = vpop.f32.mrb[0].mxu0
    %v750 = vadd.f32 0.0, %v749
    %v751 = vpop.f32.mrb[0].mxu0
    %752 = vmatprep.mubr.bf16.mxu0 %v600
    %753 = vmatmul.mubr.bf16.gmra.mrb[0].mxu0 %v437
    %v754 = vpop.f32.mrb[0].mxu0
    %v755 = vadd.f32 0.0, %v754
    %v756 = vpop.f32.mrb[0].mxu0
    %v757 = vpop.f32.mrb[0].mxu0
    %v758 = vadd.f32 0.0, %v757
    %v759 = vpop.f32.mrb[0].mxu0
    %760 = vmatprep.mubr.bf16.mxu0 %v603
    %761 = vmatmul.mubr.bf16.gmra.mrb[0].mxu0 %v439
    %v762 = vpop.f32.mrb[0].mxu0
    %v763 = vadd.f32 0.0, %v762
    %v764 = vpop.f32.mrb[0].mxu0
    %v765 = vpop.f32.mrb[0].mxu0
    %v766 = vadd.f32 0.0, %v765
    %v767 = vpop.f32.mrb[0].mxu0
    %768 = vmatprep.mubr.bf16.mxu0 %v606
    %769 = vmatmul.mubr.bf16.gmra.mrb[0].mxu0 %v441
    %v770 = vpop.f32.mrb[0].mxu0
    %v771 = vadd.f32 0.0, %v770
    %v772 = vpop.f32.mrb[0].mxu0
    %v773 = vpop.f32.mrb[0].mxu0
    %v774 = vadd.f32 0.0, %v773
    %v775 = vpop.f32.mrb[0].mxu0
    %776 = vmatprep.mubr.bf16.mxu0 %v609
    %777 = vmatmul.mubr.bf16.gmra.mrb[0].mxu0 %v443
    %v778 = vpop.f32.mrb[0].mxu0
    %v779 = vadd.f32 0.0, %v778
    %v780 = vpop.f32.mrb[0].mxu0
    %v781 = vpop.f32.mrb[0].mxu0
    %v782 = vadd.f32 0.0, %v781
    %v783 = vpop.f32.mrb[0].mxu0
    %784 = vmatprep.mubr.bf16.mxu0 %v612
    %785 = vmatmul.mubr.bf16.gmra.mrb[0].mxu0 %v445
    %v786 = vpop.f32.mrb[0].mxu0
    %v787 = vadd.f32 0.0, %v786
    %v788 = vpop.f32.mrb[0].mxu0
    %v789 = vpop.f32.mrb[0].mxu0
    %v790 = vadd.f32 0.0, %v789
    %v791 = vpop.f32.mrb[0].mxu0
    %792 = vmatprep.mubr.bf16.mxu0 %v615
    %793 = vmatmul.mubr.bf16.gmra.mrb[0].mxu0 %v447
    %v794 = vpop.f32.mrb[0].mxu0
    %v795 = vadd.f32 0.0, %v794
    %v796 = vpop.f32.mrb[0].mxu0
    %v797 = vpop.f32.mrb[0].mxu0
    %v798 = vadd.f32 0.0, %v797
    %v799 = vpop.f32.mrb[0].mxu0
    %800 = vmatprep.mubr.bf16.mxu0 %v618
    %801 = vmatmul.mubr.bf16.gmra.mrb[0].mxu0 %v449
    %v802 = vpop.f32.mrb[0].mxu0
    %v803 = vadd.f32 0.0, %v802
    %v804 = vpop.f32.mrb[0].mxu0
    %v805 = vpop.f32.mrb[0].mxu0
    %v806 = vadd.f32 0.0, %v805
    %v807 = vpop.f32.mrb[0].mxu0
    %808 = vmatprep.mubr.bf16.mxu0 %v621
    %809 = vmatmul.mubr.bf16.gmra.mrb[0].mxu0 %v451
    %v810 = vpop.f32.mrb[0].mxu0
    %v811 = vadd.f32 0.0, %v810
    %v812 = vpop.f32.mrb[0].mxu0
    %v813 = vpop.f32.mrb[0].mxu0
    %v814 = vadd.f32 0.0, %v813
    %v815 = vpop.f32.mrb[0].mxu0
    %816 = vmatprep.mubr.bf16.mxu0 %v624
    %817 = vmatmul.mubr.bf16.gmra.mrb[0].mxu0 %v453
    %v818 = vpop.f32.mrb[0].mxu0
    %v819 = vadd.f32 0.0, %v818
    %v820 = vpop.f32.mrb[0].mxu0
    %v821 = vpop.f32.mrb[0].mxu0
    %v822 = vadd.f32 0.0, %v821
    %v823 = vpop.f32.mrb[0].mxu0
    %824 = vmatprep.mubr.bf16.mxu0 %v627
    %825 = vmatmul.mubr.bf16.gmra.mrb[0].mxu0 %v455
    %v826 = vpop.f32.mrb[0].mxu0
    %v827 = vadd.f32 0.0, %v826
    %v828 = vpop.f32.mrb[0].mxu0
    %v829 = vpop.f32.mrb[0].mxu0
    %v830 = vadd.f32 0.0, %v829
    %v831 = vpop.f32.mrb[0].mxu0
    %832 = vmatprep.mubr.bf16.mxu0 %v630
    %833 = vmatmul.mubr.bf16.gmra.mrb[0].mxu0 %v457
    %v834 = vpop.f32.mrb[0].mxu0
    %v835 = vadd.f32 0.0, %v834
    %v836 = vpop.f32.mrb[0].mxu0
    %v837 = vpop.f32.mrb[0].mxu0
    %v838 = vadd.f32 0.0, %v837
    %v839 = vpop.f32.mrb[0].mxu0
    %840 = vmatprep.mubr.bf16.mxu0 %v633
    %841 = vmatmul.mubr.bf16.gmra.mrb[0].mxu0 %v459
    %v842 = vpop.f32.mrb[0].mxu0
    %v843 = vadd.f32 0.0, %v842
    %v844 = vpop.f32.mrb[0].mxu0
    %v845 = vpop.f32.mrb[0].mxu0
    %v846 = vadd.f32 0.0, %v845
    %v847 = vpop.f32.mrb[0].mxu0
    %848 = vmatprep.mubr.bf16.mxu0 %v636
    %849 = vmatmul.mubr.bf16.gmra.mrb[0].mxu0 %v461
    %v850 = vpop.f32.mrb[0].mxu0
    %v851 = vadd.f32 0.0, %v850
    %v852 = vpop.f32.mrb[0].mxu0
    %v853 = vpop.f32.mrb[0].mxu0
    %v854 = vadd.f32 0.0, %v853
    %v855 = vpop.f32.mrb[0].mxu0
    %856 = vmatprep.mubr.bf16.mxu0 %v639
    %857 = vmatmul.mubr.bf16.gmra.mrb[0].mxu0 %v463
    %v858 = vpop.f32.mrb[0].mxu0
    %v859 = vadd.f32 0.0, %v858
    %v860 = vpop.f32.mrb[0].mxu0
    %v861 = vpop.f32.mrb[0].mxu0
    %v862 = vadd.f32 0.0, %v861
    %v863 = vpop.f32.mrb[0].mxu0
    %864 = vmatprep.mubr.bf16.mxu0 %v642
    %865 = vmatmul.mubr.bf16.gmra.mrb[0].mxu0 %v465
    %v866 = vpop.f32.mrb[0].mxu0
    %v867 = vadd.f32 0.0, %v866
    %v868 = vpop.f32.mrb[0].mxu0
    %v869 = vpop.f32.mrb[0].mxu0
    %v870 = vadd.f32 0.0, %v869
    %v871 = vpop.f32.mrb[0].mxu0
    %872 = vmatprep.mubr.bf16.mxu0 %v645
    %873 = vmatmul.mubr.bf16.gmra.mrb[0].mxu0 %v467
    %v874 = vpop.f32.mrb[0].mxu0
    %v875 = vadd.f32 0.0, %v874
    %v876 = vpop.f32.mrb[0].mxu0
    %v877 = vpop.f32.mrb[0].mxu0
    %v878 = vadd.f32 0.0, %v877
    %v879 = vpop.f32.mrb[0].mxu0
    %880 = vmatprep.mubr.bf16.mxu0 %v648
    %881 = vmatmul.mubr.bf16.gmra.mrb[0].mxu0 %v469
    %v882 = vpop.f32.mrb[0].mxu0
    %v883 = vadd.f32 0.0, %v882
    %v884 = vpop.f32.mrb[0].mxu0
    %v885 = vpop.f32.mrb[0].mxu0
    %v886 = vadd.f32 0.0, %v885
    %v887 = vpop.f32.mrb[0].mxu0
    %888 = vmatprep.mubr.bf16.mxu0 %v651
    %889 = vmatmul.mubr.bf16.gmra.mrb[0].mxu0 %v471
    %v890 = vpop.f32.mrb[0].mxu0
    %v891 = vadd.f32 0.0, %v890
    %v892 = vpop.f32.mrb[0].mxu0
    %v893 = vpop.f32.mrb[0].mxu0
    %v894 = vadd.f32 0.0, %v893
    %v895 = vpop.f32.mrb[0].mxu0
    %896 = vmatprep.mubr.bf16.mxu0 %v654
    %897 = vmatmul.mubr.bf16.gmra.mrb[0].mxu0 %v473
    %v898 = vpop.f32.mrb[0].mxu0
    %v899 = vadd.f32 0.0, %v898
    %v900 = vpop.f32.mrb[0].mxu0
    %v901 = vpop.f32.mrb[0].mxu0
    %v902 = vadd.f32 0.0, %v901
    %v903 = vpop.f32.mrb[0].mxu0
    %904 = vmatprep.mubr.bf16.mxu0 %v657
    %905 = vmatmul.mubr.bf16.gmra.mrb[0].mxu0 %v475
    %v906 = vpop.f32.mrb[0].mxu0
    %v907 = vadd.f32 0.0, %v906
    %v908 = vpop.f32.mrb[0].mxu0
    %v909 = vpop.f32.mrb[0].mxu0
    %v910 = vadd.f32 0.0, %v909
    %v911 = vpop.f32.mrb[0].mxu0
    %912 = vmatprep.mubr.bf16.mxu0 %v660
    %913 = vmatmul.mubr.bf16.gmra.mrb[0].mxu0 %v477
    %v914 = vpop.f32.mrb[0].mxu0
    %v915 = vadd.f32 0.0, %v914
    %v916 = vpop.f32.mrb[0].mxu0
    %v917 = vpop.f32.mrb[0].mxu0
    %v918 = vadd.f32 0.0, %v917
    %v919 = vpop.f32.mrb[0].mxu0
    %920 = vmatprep.mubr.bf16.mxu0 %v663
    %921 = vmatmul.mubr.bf16.gmra.mrb[0].mxu0 %v479
    %v922 = vpop.f32.mrb[0].mxu0
    %v923 = vadd.f32 0.0, %v922
    %v924 = vpop.f32.mrb[0].mxu0
    %v925 = vpop.f32.mrb[0].mxu0
    %v926 = vadd.f32 0.0, %v925
    %v927 = vpop.f32.mrb[0].mxu0
    %928 = vmatprep.mubr.bf16.mxu0 %v666
    %929 = vmatmul.mubr.bf16.gmra.mrb[0].mxu0 %v481
    %v930 = vpop.f32.mrb[0].mxu0
    %v931 = vadd.f32 0.0, %v930
    %v932 = vpop.f32.mrb[0].mxu0
    %v933 = vpop.f32.mrb[0].mxu0
    %v934 = vadd.f32 0.0, %v933
    %v935 = vpop.f32.mrb[0].mxu0
    %936 = vmatprep.mubr.bf16.mxu0 %v669
    %937 = vmatmul.mubr.bf16.gmra.mrb[0].mxu0 %v483
    %v938 = vpop.f32.mrb[0].mxu0
    %v939 = vadd.f32 0.0, %v938
    %v940 = vpop.f32.mrb[0].mxu0
    %v941 = vpop.f32.mrb[0].mxu0
    %v942 = vadd.f32 0.0, %v941
    %v943 = vpop.f32.mrb[0].mxu0
    %944 = vmatprep.mubr.bf16.mxu0 %v672
    %945 = vmatmul.mubr.bf16.gmra.mrb[0].mxu0 %v485
    %v946 = vpop.f32.mrb[0].mxu0
    %v947 = vadd.f32 0.0, %v946
    %v948 = vpop.f32.mrb[0].mxu0
    %v949 = vpop.f32.mrb[0].mxu0
    %v950 = vadd.f32 0.0, %v949
    %v951 = vpop.f32.mrb[0].mxu0
    %952 = vmatprep.mubr.bf16.mxu0 %v675
    %953 = vmatmul.mubr.bf16.gmra.mrb[0].mxu0 %v487
    %v954 = vpop.f32.mrb[0].mxu0
    %v955 = vadd.f32 0.0, %v954
    %v956 = vpop.f32.mrb[0].mxu0
    %v957 = vpop.f32.mrb[0].mxu0
    %v958 = vadd.f32 0.0, %v957
    %v959 = vpop.f32.mrb[0].mxu0
    %960 = vmatprep.mubr.bf16.mxu0 %v678
    %961 = vmatmul.mubr.bf16.gmra.mrb[0].mxu0 %v489
    %v962 = vpop.f32.mrb[0].mxu0
    %v963 = vadd.f32 0.0, %v962
    %v964 = vpop.f32.mrb[0].mxu0
    %v965 = vpop.f32.mrb[0].mxu0
    %v966 = vadd.f32 0.0, %v965
    %v967 = vpop.f32.mrb[0].mxu0
    %968 = vdwg.mxu0
    %v969 = vadd.f32 %v87, %v715
    %v970 = vadd.f32 %v88, %v718
    %v971 = vadd.f32 %v89, %v723
    %v972 = vadd.f32 %v90, %v726
    %v973 = vadd.f32 %v91, %v731
    %v974 = vadd.f32 %v92, %v734
    %v975 = vadd.f32 %v93, %v739
    %v976 = vadd.f32 %v94, %v742
    %v977 = vadd.f32 %v95, %v747
    %v978 = vadd.f32 %v96, %v750
    %v979 = vadd.f32 %v97, %v755
    %v980 = vadd.f32 %v98, %v758
    %v981 = vadd.f32 %v99, %v763
    %v982 = vadd.f32 %v100, %v766
    %v983 = vadd.f32 %v101, %v771
    %v984 = vadd.f32 %v102, %v774
    %v985 = vadd.f32 %v103, %v779
    %v986 = vadd.f32 %v104, %v782
    %v987 = vadd.f32 %v105, %v787
    %v988 = vadd.f32 %v106, %v790
    %v989 = vadd.f32 %v107, %v795
    %v990 = vadd.f32 %v108, %v798
    %v991 = vadd.f32 %v109, %v803
    %v992 = vadd.f32 %v110, %v806
    %v993 = vadd.f32 %v111, %v811
    %v994 = vadd.f32 %v112, %v814
    %v995 = vadd.f32 %v113, %v819
    %v996 = vadd.f32 %v114, %v822
    %v997 = vadd.f32 %v115, %v827
    %v998 = vadd.f32 %v116, %v830
    %v999 = vadd.f32 %v117, %v835
    %v1000 = vadd.f32 %v118, %v838
    %v1001 = vadd.f32 %v119, %v843
    %v1002 = vadd.f32 %v120, %v846
    %v1003 = vadd.f32 %v121, %v851
    %v1004 = vadd.f32 %v122, %v854
    %v1005 = vadd.f32 %v123, %v859
    %v1006 = vadd.f32 %v124, %v862
    %v1007 = vadd.f32 %v125, %v867
    %v1008 = vadd.f32 %v126, %v870
    %v1009 = vadd.f32 %v127, %v875
    %v1010 = vadd.f32 %v128, %v878
    %v1011 = vadd.f32 %v129, %v883
    %v1012 = vadd.f32 %v130, %v886
    %v1013 = vadd.f32 %v131, %v891
    %v1014 = vadd.f32 %v132, %v894
    %v1015 = vadd.f32 %v133, %v899
    %v1016 = vadd.f32 %v134, %v902
    %v1017 = vadd.f32 %v135, %v907
    %v1018 = vadd.f32 %v136, %v910
    %v1019 = vadd.f32 %v137, %v915
    %v1020 = vadd.f32 %v138, %v918
    %v1021 = vadd.f32 %v139, %v923
    %v1022 = vadd.f32 %v140, %v926
    %v1023 = vadd.f32 %v141, %v931
    %v1024 = vadd.f32 %v142, %v934
    %v1025 = vadd.f32 %v143, %v939
    %v1026 = vadd.f32 %v144, %v942
    %v1027 = vadd.f32 %v145, %v947
    %v1028 = vadd.f32 %v146, %v950
    %v1029 = vadd.f32 %v147, %v955
    %v1030 = vadd.f32 %v148, %v958
    %v1031 = vadd.f32 %v149, %v963
    %v1032 = vadd.f32 %v150, %v966
    %1033 = vst [vmem:[#allocation2] sm:$0xff] %v969
    %1034 = vst [vmem:[#allocation2 + $0x8] sm:$0xff] %v970
    %1035 = vst [vmem:[#allocation2 + $0x10] sm:$0xff] %v971
    %1036 = vst [vmem:[#allocation2 + $0x18] sm:$0xff] %v972
    %1037 = vst [vmem:[#allocation2 + $0x20] sm:$0xff] %v973
    %1038 = vst [vmem:[#allocation2 + $0x28] sm:$0xff] %v974
    %1039 = vst [vmem:[#allocation2 + $0x30] sm:$0xff] %v975
    %1040 = vst [vmem:[#allocation2 + $0x38] sm:$0xff] %v976
    %1041 = vst [vmem:[#allocation2 + $0x40] sm:$0xff] %v977
    %1042 = vst [vmem:[#allocation2 + $0x48] sm:$0xff] %v978
    %1043 = vst [vmem:[#allocation2 + $0x50] sm:$0xff] %v979
    %1044 = vst [vmem:[#allocation2 + $0x58] sm:$0xff] %v980
    %1045 = vst [vmem:[#allocation2 + $0x60] sm:$0xff] %v981
    %1046 = vst [vmem:[#allocation2 + $0x68] sm:$0xff] %v982
    %1047 = vst [vmem:[#allocation2 + $0x70] sm:$0xff] %v983
    %1048 = vst [vmem:[#allocation2 + $0x78] sm:$0xff] %v984
    %1049 = vst [vmem:[#allocation2 + $0x80] sm:$0xff] %v985
    %1050 = vst [vmem:[#allocation2 + $0x88] sm:$0xff] %v986
    %1051 = vst [vmem:[#allocation2 + $0x90] sm:$0xff] %v987
    %1052 = vst [vmem:[#allocation2 + $0x98] sm:$0xff] %v988
    %1053 = vst [vmem:[#allocation2 + $0xa0] sm:$0xff] %v989
    %1054 = vst [vmem:[#allocation2 + $0xa8] sm:$0xff] %v990
    %1055 = vst [vmem:[#allocation2 + $0xb0] sm:$0xff] %v991
    %1056 = vst [vmem:[#allocation2 + $0xb8] sm:$0xff] %v992
    %1057 = vst [vmem:[#allocation2 + $0xc0] sm:$0xff] %v993
    %1058 = vst [vmem:[#allocation2 + $0xc8] sm:$0xff] %v994
    %1059 = vst [vmem:[#allocation2 + $0xd0] sm:$0xff] %v995
    %1060 = vst [vmem:[#allocation2 + $0xd8] sm:$0xff] %v996
    %1061 = vst [vmem:[#allocation2 + $0xe0] sm:$0xff] %v997
    %1062 = vst [vmem:[#allocation2 + $0xe8] sm:$0xff] %v998
    %1063 = vst [vmem:[#allocation2 + $0xf0] sm:$0xff] %v999
    %1064 = vst [vmem:[#allocation2 + $0xf8] sm:$0xff] %v1000
    %1065 = vst [vmem:[#allocation2 + $0x100] sm:$0xff] %v1001
    %1066 = vst [vmem:[#allocation2 + $0x108] sm:$0xff] %v1002
    %1067 = vst [vmem:[#allocation2 + $0x110] sm:$0xff] %v1003
    %1068 = vst [vmem:[#allocation2 + $0x118] sm:$0xff] %v1004
    %1069 = vst [vmem:[#allocation2 + $0x120] sm:$0xff] %v1005
    %1070 = vst [vmem:[#allocation2 + $0x128] sm:$0xff] %v1006
    %1071 = vst [vmem:[#allocation2 + $0x130] sm:$0xff] %v1007
    %1072 = vst [vmem:[#allocation2 + $0x138] sm:$0xff] %v1008
    %1073 = vst [vmem:[#allocation2 + $0x140] sm:$0xff] %v1009
    %1074 = vst [vmem:[#allocation2 + $0x148] sm:$0xff] %v1010
    %1075 = vst [vmem:[#allocation2 + $0x150] sm:$0xff] %v1011
    %1076 = vst [vmem:[#allocation2 + $0x158] sm:$0xff] %v1012
    %1077 = vst [vmem:[#allocation2 + $0x160] sm:$0xff] %v1013
    %1078 = vst [vmem:[#allocation2 + $0x168] sm:$0xff] %v1014
    %1079 = vst [vmem:[#allocation2 + $0x170] sm:$0xff] %v1015
    %1080 = vst [vmem:[#allocation2 + $0x178] sm:$0xff] %v1016
    %1081 = vst [vmem:[#allocation2 + $0x180] sm:$0xff] %v1017
    %1082 = vst [vmem:[#allocation2 + $0x188] sm:$0xff] %v1018
    %1083 = vst [vmem:[#allocation2 + $0x190] sm:$0xff] %v1019
    %1084 = vst [vmem:[#allocation2 + $0x198] sm:$0xff] %v1020
    %1085 = vst [vmem:[#allocation2 + $0x1a0] sm:$0xff] %v1021
    %1086 = vst [vmem:[#allocation2 + $0x1a8] sm:$0xff] %v1022
    %1087 = vst [vmem:[#allocation2 + $0x1b0] sm:$0xff] %v1023
    %1088 = vst [vmem:[#allocation2 + $0x1b8] sm:$0xff] %v1024
    %1089 = vst [vmem:[#allocation2 + $0x1c0] sm:$0xff] %v1025
    %1090 = vst [vmem:[#allocation2 + $0x1c8] sm:$0xff] %v1026
    %1091 = vst [vmem:[#allocation2 + $0x1d0] sm:$0xff] %v1027
    %1092 = vst [vmem:[#allocation2 + $0x1d8] sm:$0xff] %v1028
    %1093 = vst [vmem:[#allocation2 + $0x1e0] sm:$0xff] %v1029
    %1094 = vst [vmem:[#allocation2 + $0x1e8] sm:$0xff] %v1030
    %1095 = vst [vmem:[#allocation2 + $0x1f0] sm:$0xff] %v1031
    %1096 = vst [vmem:[#allocation2 + $0x1f8] sm:$0xff] %v1032
    // Predicated region
    $region22: #{matmul_scale_bias.1} parent=1 // pred_check
      %p1097 = pneg %p19
    $region23: #{matmul_scale_bias.1} parent=1 // pred_check_branch
      %1099 = sbr.rel (%p1097) target = $region25
    $region24: #{matmul_scale_bias.1} parent=1 // pred_region
      %v1100 = vld [vmem:[#allocation2] sm:$0xff]
      %v1101 = vld [vmem:[#allocation2 + $0x8] sm:$0xff]
      %v1102 = vld [vmem:[#allocation2 + $0x10] sm:$0xff]
      %v1103 = vld [vmem:[#allocation2 + $0x18] sm:$0xff]
      %v1104 = vld [vmem:[#allocation2 + $0x20] sm:$0xff]
      %v1105 = vld [vmem:[#allocation2 + $0x28] sm:$0xff]
      %v1106 = vld [vmem:[#allocation2 + $0x30] sm:$0xff]
      %v1107 = vld [vmem:[#allocation2 + $0x38] sm:$0xff]
      %v1108 = vld [vmem:[#allocation2 + $0x40] sm:$0xff]
      %v1109 = vld [vmem:[#allocation2 + $0x48] sm:$0xff]
      %v1110 = vld [vmem:[#allocation2 + $0x50] sm:$0xff]
      %v1111 = vld [vmem:[#allocation2 + $0x58] sm:$0xff]
      %v1112 = vld [vmem:[#allocation2 + $0x60] sm:$0xff]
      %v1113 = vld [vmem:[#allocation2 + $0x68] sm:$0xff]
      %v1114 = vld [vmem:[#allocation2 + $0x70] sm:$0xff]
      %v1115 = vld [vmem:[#allocation2 + $0x78] sm:$0xff]
      %v1116 = vld [vmem:[#allocation2 + $0x80] sm:$0xff]
      %v1117 = vld [vmem:[#allocation2 + $0x88] sm:$0xff]
      %v1118 = vld [vmem:[#allocation2 + $0x90] sm:$0xff]
      %v1119 = vld [vmem:[#allocation2 + $0x98] sm:$0xff]
      %v1120 = vld [vmem:[#allocation2 + $0xa0] sm:$0xff]
      %v1121 = vld [vmem:[#allocation2 + $0xa8] sm:$0xff]
      %v1122 = vld [vmem:[#allocation2 + $0xb0] sm:$0xff]
      %v1123 = vld [vmem:[#allocation2 + $0xb8] sm:$0xff]
      %v1124 = vld [vmem:[#allocation2 + $0xc0] sm:$0xff]
      %v1125 = vld [vmem:[#allocation2 + $0xc8] sm:$0xff]
      %v1126 = vld [vmem:[#allocation2 + $0xd0] sm:$0xff]
      %v1127 = vld [vmem:[#allocation2 + $0xd8] sm:$0xff]
      %v1128 = vld [vmem:[#allocation2 + $0xe0] sm:$0xff]
      %v1129 = vld [vmem:[#allocation2 + $0xe8] sm:$0xff]
      %v1130 = vld [vmem:[#allocation2 + $0xf0] sm:$0xff]
      %v1131 = vld [vmem:[#allocation2 + $0xf8] sm:$0xff]
      %v1132 = vld [vmem:[#allocation2 + $0x100] sm:$0xff]
      %v1133 = vld [vmem:[#allocation2 + $0x108] sm:$0xff]
      %v1134 = vld [vmem:[#allocation2 + $0x110] sm:$0xff]
      %v1135 = vld [vmem:[#allocation2 + $0x118] sm:$0xff]
      %v1136 = vld [vmem:[#allocation2 + $0x120] sm:$0xff]
      %v1137 = vld [vmem:[#allocation2 + $0x128] sm:$0xff]
      %v1138 = vld [vmem:[#allocation2 + $0x130] sm:$0xff]
      %v1139 = vld [vmem:[#allocation2 + $0x138] sm:$0xff]
      %v1140 = vld [vmem:[#allocation2 + $0x140] sm:$0xff]
      %v1141 = vld [vmem:[#allocation2 + $0x148] sm:$0xff]
      %v1142 = vld [vmem:[#allocation2 + $0x150] sm:$0xff]
      %v1143 = vld [vmem:[#allocation2 + $0x158] sm:$0xff]
      %v1144 = vld [vmem:[#allocation2 + $0x160] sm:$0xff]
      %v1145 = vld [vmem:[#allocation2 + $0x168] sm:$0xff]
      %v1146 = vld [vmem:[#allocation2 + $0x170] sm:$0xff]
      %v1147 = vld [vmem:[#allocation2 + $0x178] sm:$0xff]
      %v1148 = vld [vmem:[#allocation2 + $0x180] sm:$0xff]
      %v1149 = vld [vmem:[#allocation2 + $0x188] sm:$0xff]
      %v1150 = vld [vmem:[#allocation2 + $0x190] sm:$0xff]
      %v1151 = vld [vmem:[#allocation2 + $0x198] sm:$0xff]
      %v1152 = vld [vmem:[#allocation2 + $0x1a0] sm:$0xff]
      %v1153 = vld [vmem:[#allocation2 + $0x1a8] sm:$0xff]
      %v1154 = vld [vmem:[#allocation2 + $0x1b0] sm:$0xff]
      %v1155 = vld [vmem:[#allocation2 + $0x1b8] sm:$0xff]
      %v1156 = vld [vmem:[#allocation2 + $0x1c0] sm:$0xff]
      %v1157 = vld [vmem:[#allocation2 + $0x1c8] sm:$0xff]
      %v1158 = vld [vmem:[#allocation2 + $0x1d0] sm:$0xff]
      %v1159 = vld [vmem:[#allocation2 + $0x1d8] sm:$0xff]
      %v1160 = vld [vmem:[#allocation2 + $0x1e0] sm:$0xff]
      %v1161 = vld [vmem:[#allocation2 + $0x1e8] sm:$0xff]
      %v1162 = vld [vmem:[#allocation2 + $0x1f0] sm:$0xff]
      %v1163 = vld [vmem:[#allocation2 + $0x1f8] sm:$0xff]
      %v1164 = vld [vmem:[%s2] sm:$0x1]
      %v1166 = vlaneseq
      %v1167 = vshrl.u32 %v1166, 7
      %v1168 = vsub.s32 0, %v1167
      %v1169 = vrot.slane %v1164, %v1168
      %v1171 = vmul.f32 %v1100, %v1169
      %v1172 = vmul.f32 %v1101, %v1169
      %v1173 = vmul.f32 %v1102, %v1169
      %v1174 = vmul.f32 %v1103, %v1169
      %v1175 = vmul.f32 %v1104, %v1169
      %v1176 = vmul.f32 %v1105, %v1169
      %v1177 = vmul.f32 %v1106, %v1169
      %v1178 = vmul.f32 %v1107, %v1169
      %v1179 = vmul.f32 %v1108, %v1169
      %v1180 = vmul.f32 %v1109, %v1169
      %v1181 = vmul.f32 %v1110, %v1169
      %v1182 = vmul.f32 %v1111, %v1169
      %v1183 = vmul.f32 %v1112, %v1169
      %v1184 = vmul.f32 %v1113, %v1169
      %v1185 = vmul.f32 %v1114, %v1169
      %v1186 = vmul.f32 %v1115, %v1169
      %v1187 = vmul.f32 %v1116, %v1169
      %v1188 = vmul.f32 %v1117, %v1169
      %v1189 = vmul.f32 %v1118, %v1169
      %v1190 = vmul.f32 %v1119, %v1169
      %v1191 = vmul.f32 %v1120, %v1169
      %v1192 = vmul.f32 %v1121, %v1169
      %v1193 = vmul.f32 %v1122, %v1169
      %v1194 = vmul.f32 %v1123, %v1169
      %v1195 = vmul.f32 %v1124, %v1169
      %v1196 = vmul.f32 %v1125, %v1169
      %v1197 = vmul.f32 %v1126, %v1169
      %v1198 = vmul.f32 %v1127, %v1169
      %v1199 = vmul.f32 %v1128, %v1169
      %v1200 = vmul.f32 %v1129, %v1169
      %v1201 = vmul.f32 %v1130, %v1169
      %v1202 = vmul.f32 %v1131, %v1169
      %v1203 = vmul.f32 %v1132, %v1169
      %v1204 = vmul.f32 %v1133, %v1169
      %v1205 = vmul.f32 %v1134, %v1169
      %v1206 = vmul.f32 %v1135, %v1169
      %v1207 = vmul.f32 %v1136, %v1169
      %v1208 = vmul.f32 %v1137, %v1169
      %v1209 = vmul.f32 %v1138, %v1169
      %v1210 = vmul.f32 %v1139, %v1169
      %v1211 = vmul.f32 %v1140, %v1169
      %v1212 = vmul.f32 %v1141, %v1169
      %v1213 = vmul.f32 %v1142, %v1169
      %v1214 = vmul.f32 %v1143, %v1169
      %v1215 = vmul.f32 %v1144, %v1169
      %v1216 = vmul.f32 %v1145, %v1169
      %v1217 = vmul.f32 %v1146, %v1169
      %v1218 = vmul.f32 %v1147, %v1169
      %v1219 = vmul.f32 %v1148, %v1169
      %v1220 = vmul.f32 %v1149, %v1169
      %v1221 = vmul.f32 %v1150, %v1169
      %v1222 = vmul.f32 %v1151, %v1169
      %v1223 = vmul.f32 %v1152, %v1169
      %v1224 = vmul.f32 %v1153, %v1169
      %v1225 = vmul.f32 %v1154, %v1169
      %v1226 = vmul.f32 %v1155, %v1169
      %v1227 = vmul.f32 %v1156, %v1169
      %v1228 = vmul.f32 %v1157, %v1169
      %v1229 = vmul.f32 %v1158, %v1169
      %v1230 = vmul.f32 %v1159, %v1169
      %v1231 = vmul.f32 %v1160, %v1169
      %v1232 = vmul.f32 %v1161, %v1169
      %v1233 = vmul.f32 %v1162, %v1169
      %v1234 = vmul.f32 %v1163, %v1169
      %v1235 = vld [vmem:[%s3] sm:$0x1]
      %v1237 = vlaneseq
      %v1238 = vshrl.u32 %v1237, 7
      %v1239 = vsub.s32 0, %v1238
      %v1240 = vrot.slane %v1235, %v1239
      %v1242 = vadd.f32 %v1171, %v1240
      %v1243 = vadd.f32 %v1172, %v1240
      %v1244 = vadd.f32 %v1173, %v1240
      %v1245 = vadd.f32 %v1174, %v1240
      %v1246 = vadd.f32 %v1175, %v1240
      %v1247 = vadd.f32 %v1176, %v1240
      %v1248 = vadd.f32 %v1177, %v1240
      %v1249 = vadd.f32 %v1178, %v1240
      %v1250 = vadd.f32 %v1179, %v1240
      %v1251 = vadd.f32 %v1180, %v1240
      %v1252 = vadd.f32 %v1181, %v1240
      %v1253 = vadd.f32 %v1182, %v1240
      %v1254 = vadd.f32 %v1183, %v1240
      %v1255 = vadd.f32 %v1184, %v1240
      %v1256 = vadd.f32 %v1185, %v1240
      %v1257 = vadd.f32 %v1186, %v1240
      %v1258 = vadd.f32 %v1187, %v1240
      %v1259 = vadd.f32 %v1188, %v1240
      %v1260 = vadd.f32 %v1189, %v1240
      %v1261 = vadd.f32 %v1190, %v1240
      %v1262 = vadd.f32 %v1191, %v1240
      %v1263 = vadd.f32 %v1192, %v1240
      %v1264 = vadd.f32 %v1193, %v1240
      %v1265 = vadd.f32 %v1194, %v1240
      %v1266 = vadd.f32 %v1195, %v1240
      %v1267 = vadd.f32 %v1196, %v1240
      %v1268 = vadd.f32 %v1197, %v1240
      %v1269 = vadd.f32 %v1198, %v1240
      %v1270 = vadd.f32 %v1199, %v1240
      %v1271 = vadd.f32 %v1200, %v1240
      %v1272 = vadd.f32 %v1201, %v1240
      %v1273 = vadd.f32 %v1202, %v1240
      %v1274 = vadd.f32 %v1203, %v1240
      %v1275 = vadd.f32 %v1204, %v1240
      %v1276 = vadd.f32 %v1205, %v1240
      %v1277 = vadd.f32 %v1206, %v1240
      %v1278 = vadd.f32 %v1207, %v1240
      %v1279 = vadd.f32 %v1208, %v1240
      %v1280 = vadd.f32 %v1209, %v1240
      %v1281 = vadd.f32 %v1210, %v1240
      %v1282 = vadd.f32 %v1211, %v1240
      %v1283 = vadd.f32 %v1212, %v1240
      %v1284 = vadd.f32 %v1213, %v1240
      %v1285 = vadd.f32 %v1214, %v1240
      %v1286 = vadd.f32 %v1215, %v1240
      %v1287 = vadd.f32 %v1216, %v1240
      %v1288 = vadd.f32 %v1217, %v1240
      %v1289 = vadd.f32 %v1218, %v1240
      %v1290 = vadd.f32 %v1219, %v1240
      %v1291 = vadd.f32 %v1220, %v1240
      %v1292 = vadd.f32 %v1221, %v1240
      %v1293 = vadd.f32 %v1222, %v1240
      %v1294 = vadd.f32 %v1223, %v1240
      %v1295 = vadd.f32 %v1224, %v1240
      %v1296 = vadd.f32 %v1225, %v1240
      %v1297 = vadd.f32 %v1226, %v1240
      %v1298 = vadd.f32 %v1227, %v1240
      %v1299 = vadd.f32 %v1228, %v1240
      %v1300 = vadd.f32 %v1229, %v1240
      %v1301 = vadd.f32 %v1230, %v1240
      %v1302 = vadd.f32 %v1231, %v1240
      %v1303 = vadd.f32 %v1232, %v1240
      %v1304 = vadd.f32 %v1233, %v1240
      %v1305 = vadd.f32 %v1234, %v1240
      %v1306 = vmax.f32 %v1242, 0.0
      %v1307 = vmax.f32 %v1243, 0.0
      %v1308 = vmax.f32 %v1244, 0.0
      %v1309 = vmax.f32 %v1245, 0.0
      %v1310 = vmax.f32 %v1246, 0.0
      %v1311 = vmax.f32 %v1247, 0.0
      %v1312 = vmax.f32 %v1248, 0.0
      %v1313 = vmax.f32 %v1249, 0.0
      %v1314 = vmax.f32 %v1250, 0.0
      %v1315 = vmax.f32 %v1251, 0.0
      %v1316 = vmax.f32 %v1252, 0.0
      %v1317 = vmax.f32 %v1253, 0.0
      %v1318 = vmax.f32 %v1254, 0.0
      %v1319 = vmax.f32 %v1255, 0.0
      %v1320 = vmax.f32 %v1256, 0.0
      %v1321 = vmax.f32 %v1257, 0.0
      %v1322 = vmax.f32 %v1258, 0.0
      %v1323 = vmax.f32 %v1259, 0.0
      %v1324 = vmax.f32 %v1260, 0.0
      %v1325 = vmax.f32 %v1261, 0.0
      %v1326 = vmax.f32 %v1262, 0.0
      %v1327 = vmax.f32 %v1263, 0.0
      %v1328 = vmax.f32 %v1264, 0.0
      %v1329 = vmax.f32 %v1265, 0.0
      %v1330 = vmax.f32 %v1266, 0.0
      %v1331 = vmax.f32 %v1267, 0.0
      %v1332 = vmax.f32 %v1268, 0.0
      %v1333 = vmax.f32 %v1269, 0.0
      %v1334 = vmax.f32 %v1270, 0.0
      %v1335 = vmax.f32 %v1271, 0.0
      %v1336 = vmax.f32 %v1272, 0.0
      %v1337 = vmax.f32 %v1273, 0.0
      %v1338 = vmax.f32 %v1274, 0.0
      %v1339 = vmax.f32 %v1275, 0.0
      %v1340 = vmax.f32 %v1276, 0.0
      %v1341 = vmax.f32 %v1277, 0.0
      %v1342 = vmax.f32 %v1278, 0.0
      %v1343 = vmax.f32 %v1279, 0.0
      %v1344 = vmax.f32 %v1280, 0.0
      %v1345 = vmax.f32 %v1281, 0.0
      %v1346 = vmax.f32 %v1282, 0.0
      %v1347 = vmax.f32 %v1283, 0.0
      %v1348 = vmax.f32 %v1284, 0.0
      %v1349 = vmax.f32 %v1285, 0.0
      %v1350 = vmax.f32 %v1286, 0.0
      %v1351 = vmax.f32 %v1287, 0.0
      %v1352 = vmax.f32 %v1288, 0.0
      %v1353 = vmax.f32 %v1289, 0.0
      %v1354 = vmax.f32 %v1290, 0.0
      %v1355 = vmax.f32 %v1291, 0.0
      %v1356 = vmax.f32 %v1292, 0.0
      %v1357 = vmax.f32 %v1293, 0.0
      %v1358 = vmax.f32 %v1294, 0.0
      %v1359 = vmax.f32 %v1295, 0.0
      %v1360 = vmax.f32 %v1296, 0.0
      %v1361 = vmax.f32 %v1297, 0.0
      %v1362 = vmax.f32 %v1298, 0.0
      %v1363 = vmax.f32 %v1299, 0.0
      %v1364 = vmax.f32 %v1300, 0.0
      %v1365 = vmax.f32 %v1301, 0.0
      %v1366 = vmax.f32 %v1302, 0.0
      %v1367 = vmax.f32 %v1303, 0.0
      %v1368 = vmax.f32 %v1304, 0.0
      %v1369 = vmax.f32 %v1305, 0.0
      %v1370 = vpack.c.bf16 %v1307, %v1306
      %v1371 = vpack.c.bf16 %v1309, %v1308
      %v1372 = vpack.c.bf16 %v1311, %v1310
      %v1373 = vpack.c.bf16 %v1313, %v1312
      %v1374 = vpack.c.bf16 %v1315, %v1314
      %v1375 = vpack.c.bf16 %v1317, %v1316
      %v1376 = vpack.c.bf16 %v1319, %v1318
      %v1377 = vpack.c.bf16 %v1321, %v1320
      %v1378 = vpack.c.bf16 %v1323, %v1322
      %v1379 = vpack.c.bf16 %v1325, %v1324
      %v1380 = vpack.c.bf16 %v1327, %v1326
      %v1381 = vpack.c.bf16 %v1329, %v1328
      %v1382 = vpack.c.bf16 %v1331, %v1330
      %v1383 = vpack.c.bf16 %v1333, %v1332
      %v1384 = vpack.c.bf16 %v1335, %v1334
      %v1385 = vpack.c.bf16 %v1337, %v1336
      %v1386 = vpack.c.bf16 %v1339, %v1338
      %v1387 = vpack.c.bf16 %v1341, %v1340
      %v1388 = vpack.c.bf16 %v1343, %v1342
      %v1389 = vpack.c.bf16 %v1345, %v1344
      %v1390 = vpack.c.bf16 %v1347, %v1346
      %v1391 = vpack.c.bf16 %v1349, %v1348
      %v1392 = vpack.c.bf16 %v1351, %v1350
      %v1393 = vpack.c.bf16 %v1353, %v1352
      %v1394 = vpack.c.bf16 %v1355, %v1354
      %v1395 = vpack.c.bf16 %v1357, %v1356
      %v1396 = vpack.c.bf16 %v1359, %v1358
      %v1397 = vpack.c.bf16 %v1361, %v1360
      %v1398 = vpack.c.bf16 %v1363, %v1362
      %v1399 = vpack.c.bf16 %v1365, %v1364
      %v1400 = vpack.c.bf16 %v1367, %v1366
      %v1401 = vpack.c.bf16 %v1369, %v1368
      %v1434 = vunpack.c.l.b16 %v1370
      %v1435 = vunpack.c.h.b16 %v1370
      %v1436 = vunpack.c.l.b16 %v1371
      %v1437 = vunpack.c.h.b16 %v1371
      %v1438 = vunpack.c.l.b16 %v1372
      %v1439 = vunpack.c.h.b16 %v1372
      %v1440 = vunpack.c.l.b16 %v1373
      %v1441 = vunpack.c.h.b16 %v1373
      %v1442 = vunpack.c.l.b16 %v1374
      %v1443 = vunpack.c.h.b16 %v1374
      %v1444 = vunpack.c.l.b16 %v1375
      %v1445 = vunpack.c.h.b16 %v1375
      %v1446 = vunpack.c.l.b16 %v1376
      %v1447 = vunpack.c.h.b16 %v1376
      %v1448 = vunpack.c.l.b16 %v1377
      %v1449 = vunpack.c.h.b16 %v1377
      %v1450 = vunpack.c.l.b16 %v1378
      %v1451 = vunpack.c.h.b16 %v1378
      %v1452 = vunpack.c.l.b16 %v1379
      %v1453 = vunpack.c.h.b16 %v1379
      %v1454 = vunpack.c.l.b16 %v1380
      %v1455 = vunpack.c.h.b16 %v1380
      %v1456 = vunpack.c.l.b16 %v1381
      %v1457 = vunpack.c.h.b16 %v1381
      %v1458 = vunpack.c.l.b16 %v1382
      %v1459 = vunpack.c.h.b16 %v1382
      %v1460 = vunpack.c.l.b16 %v1383
      %v1461 = vunpack.c.h.b16 %v1383
      %v1462 = vunpack.c.l.b16 %v1384
      %v1463 = vunpack.c.h.b16 %v1384
      %v1464 = vunpack.c.l.b16 %v1385
      %v1465 = vunpack.c.h.b16 %v1385
      %v1466 = vunpack.c.l.b16 %v1386
      %v1467 = vunpack.c.h.b16 %v1386
      %v1468 = vunpack.c.l.b16 %v1387
      %v1469 = vunpack.c.h.b16 %v1387
      %v1470 = vunpack.c.l.b16 %v1388
      %v1471 = vunpack.c.h.b16 %v1388
      %v1472 = vunpack.c.l.b16 %v1389
      %v1473 = vunpack.c.h.b16 %v1389
      %v1474 = vunpack.c.l.b16 %v1390
      %v1475 = vunpack.c.h.b16 %v1390
      %v1476 = vunpack.c.l.b16 %v1391
      %v1477 = vunpack.c.h.b16 %v1391
      %v1478 = vunpack.c.l.b16 %v1392
      %v1479 = vunpack.c.h.b16 %v1392
      %v1480 = vunpack.c.l.b16 %v1393
      %v1481 = vunpack.c.h.b16 %v1393
      %v1482 = vunpack.c.l.b16 %v1394
      %v1483 = vunpack.c.h.b16 %v1394
      %v1484 = vunpack.c.l.b16 %v1395
      %v1485 = vunpack.c.h.b16 %v1395
      %v1486 = vunpack.c.l.b16 %v1396
      %v1487 = vunpack.c.h.b16 %v1396
      %v1488 = vunpack.c.l.b16 %v1397
      %v1489 = vunpack.c.h.b16 %v1397
      %v1490 = vunpack.c.l.b16 %v1398
      %v1491 = vunpack.c.h.b16 %v1398
      %v1492 = vunpack.c.l.b16 %v1399
      %v1493 = vunpack.c.h.b16 %v1399
      %v1494 = vunpack.c.l.b16 %v1400
      %v1495 = vunpack.c.h.b16 %v1400
      %v1496 = vunpack.c.l.b16 %v1401
      %v1497 = vunpack.c.h.b16 %v1401
      %v1498 = vpack.c.b16 %v1434, %v1434
      %v1499 = vpack.c.b16 %v1435, %v1435
      %v1500 = vpack.c.b16 %v1436, %v1436
      %v1501 = vpack.c.b16 %v1437, %v1437
      %v1502 = vpack.c.b16 %v1438, %v1438
      %v1503 = vpack.c.b16 %v1439, %v1439
      %v1504 = vpack.c.b16 %v1440, %v1440
      %v1505 = vpack.c.b16 %v1441, %v1441
      %v1506 = vpack.c.b16 %v1442, %v1442
      %v1507 = vpack.c.b16 %v1443, %v1443
      %v1508 = vpack.c.b16 %v1444, %v1444
      %v1509 = vpack.c.b16 %v1445, %v1445
      %v1510 = vpack.c.b16 %v1446, %v1446
      %v1511 = vpack.c.b16 %v1447, %v1447
      %v1512 = vpack.c.b16 %v1448, %v1448
      %v1513 = vpack.c.b16 %v1449, %v1449
      %v1514 = vpack.c.b16 %v1450, %v1450
      %v1515 = vpack.c.b16 %v1451, %v1451
      %v1516 = vpack.c.b16 %v1452, %v1452
      %v1517 = vpack.c.b16 %v1453, %v1453
      %v1518 = vpack.c.b16 %v1454, %v1454
      %v1519 = vpack.c.b16 %v1455, %v1455
      %v1520 = vpack.c.b16 %v1456, %v1456
      %v1521 = vpack.c.b16 %v1457, %v1457
      %v1522 = vpack.c.b16 %v1458, %v1458
      %v1523 = vpack.c.b16 %v1459, %v1459
      %v1524 = vpack.c.b16 %v1460, %v1460
      %v1525 = vpack.c.b16 %v1461, %v1461
      %v1526 = vpack.c.b16 %v1462, %v1462
      %v1527 = vpack.c.b16 %v1463, %v1463
      %v1528 = vpack.c.b16 %v1464, %v1464
      %v1529 = vpack.c.b16 %v1465, %v1465
      %v1530 = vpack.c.b16 %v1466, %v1466
      %v1531 = vpack.c.b16 %v1467, %v1467
      %v1532 = vpack.c.b16 %v1468, %v1468
      %v1533 = vpack.c.b16 %v1469, %v1469
      %v1534 = vpack.c.b16 %v1470, %v1470
      %v1535 = vpack.c.b16 %v1471, %v1471
      %v1536 = vpack.c.b16 %v1472, %v1472
      %v1537 = vpack.c.b16 %v1473, %v1473
      %v1538 = vpack.c.b16 %v1474, %v1474
      %v1539 = vpack.c.b16 %v1475, %v1475
      %v1540 = vpack.c.b16 %v1476, %v1476
      %v1541 = vpack.c.b16 %v1477, %v1477
      %v1542 = vpack.c.b16 %v1478, %v1478
      %v1543 = vpack.c.b16 %v1479, %v1479
      %v1544 = vpack.c.b16 %v1480, %v1480
      %v1545 = vpack.c.b16 %v1481, %v1481
      %v1546 = vpack.c.b16 %v1482, %v1482
      %v1547 = vpack.c.b16 %v1483, %v1483
      %v1548 = vpack.c.b16 %v1484, %v1484
      %v1549 = vpack.c.b16 %v1485, %v1485
      %v1550 = vpack.c.b16 %v1486, %v1486
      %v1551 = vpack.c.b16 %v1487, %v1487
      %v1552 = vpack.c.b16 %v1488, %v1488
      %v1553 = vpack.c.b16 %v1489, %v1489
      %v1554 = vpack.c.b16 %v1490, %v1490
      %v1555 = vpack.c.b16 %v1491, %v1491
      %v1556 = vpack.c.b16 %v1492, %v1492
      %v1557 = vpack.c.b16 %v1493, %v1493
      %v1558 = vpack.c.b16 %v1494, %v1494
      %v1559 = vpack.c.b16 %v1495, %v1495
      %v1560 = vpack.c.b16 %v1496, %v1496
      %v1561 = vpack.c.b16 %v1497, %v1497
      %1626 = vst [vmem:[#allocation3] sm:$0xf] %v1498
      %1627 = vst [vmem:[#allocation3 + $0x4] sm:$0xf] %v1499
      %1628 = vst [vmem:[#allocation3 + $0x8] sm:$0xf] %v1500
      %1629 = vst [vmem:[#allocation3 + $0xc] sm:$0xf] %v1501
      %1630 = vst [vmem:[#allocation3 + $0x10] sm:$0xf] %v1502
      %1631 = vst [vmem:[#allocation3 + $0x14] sm:$0xf] %v1503
      %1632 = vst [vmem:[#allocation3 + $0x18] sm:$0xf] %v1504
      %1633 = vst [vmem:[#allocation3 + $0x1c] sm:$0xf] %v1505
      %1634 = vst [vmem:[#allocation3 + $0x20] sm:$0xf] %v1506
      %1635 = vst [vmem:[#allocation3 + $0x24] sm:$0xf] %v1507
      %1636 = vst [vmem:[#allocation3 + $0x28] sm:$0xf] %v1508
      %1637 = vst [vmem:[#allocation3 + $0x2c] sm:$0xf] %v1509
      %1638 = vst [vmem:[#allocation3 + $0x30] sm:$0xf] %v1510
      %1639 = vst [vmem:[#allocation3 + $0x34] sm:$0xf] %v1511
      %1640 = vst [vmem:[#allocation3 + $0x38] sm:$0xf] %v1512
      %1641 = vst [vmem:[#allocation3 + $0x3c] sm:$0xf] %v1513
      %1642 = vst [vmem:[#allocation3 + $0x40] sm:$0xf] %v1514
      %1643 = vst [vmem:[#allocation3 + $0x44] sm:$0xf] %v1515
      %1644 = vst [vmem:[#allocation3 + $0x48] sm:$0xf] %v1516
      %1645 = vst [vmem:[#allocation3 + $0x4c] sm:$0xf] %v1517
      %1646 = vst [vmem:[#allocation3 + $0x50] sm:$0xf] %v1518
      %1647 = vst [vmem:[#allocation3 + $0x54] sm:$0xf] %v1519
      %1648 = vst [vmem:[#allocation3 + $0x58] sm:$0xf] %v1520
      %1649 = vst [vmem:[#allocation3 + $0x5c] sm:$0xf] %v1521
      %1650 = vst [vmem:[#allocation3 + $0x60] sm:$0xf] %v1522
      %1651 = vst [vmem:[#allocation3 + $0x64] sm:$0xf] %v1523
      %1652 = vst [vmem:[#allocation3 + $0x68] sm:$0xf] %v1524
      %1653 = vst [vmem:[#allocation3 + $0x6c] sm:$0xf] %v1525
      %1654 = vst [vmem:[#allocation3 + $0x70] sm:$0xf] %v1526
      %1655 = vst [vmem:[#allocation3 + $0x74] sm:$0xf] %v1527
      %1656 = vst [vmem:[#allocation3 + $0x78] sm:$0xf] %v1528
      %1657 = vst [vmem:[#allocation3 + $0x7c] sm:$0xf] %v1529
      %1658 = vst [vmem:[#allocation3 + $0x80] sm:$0xf] %v1530
      %1659 = vst [vmem:[#allocation3 + $0x84] sm:$0xf] %v1531
      %1660 = vst [vmem:[#allocation3 + $0x88] sm:$0xf] %v1532
      %1661 = vst [vmem:[#allocation3 + $0x8c] sm:$0xf] %v1533
      %1662 = vst [vmem:[#allocation3 + $0x90] sm:$0xf] %v1534
      %1663 = vst [vmem:[#allocation3 + $0x94] sm:$0xf] %v1535
      %1664 = vst [vmem:[#allocation3 + $0x98] sm:$0xf] %v1536
      %1665 = vst [vmem:[#allocation3 + $0x9c] sm:$0xf] %v1537
      %1666 = vst [vmem:[#allocation3 + $0xa0] sm:$0xf] %v1538
      %1667 = vst [vmem:[#allocation3 + $0xa4] sm:$0xf] %v1539
      %1668 = vst [vmem:[#allocation3 + $0xa8] sm:$0xf] %v1540
      %1669 = vst [vmem:[#allocation3 + $0xac] sm:$0xf] %v1541
      %1670 = vst [vmem:[#allocation3 + $0xb0] sm:$0xf] %v1542
      %1671 = vst [vmem:[#allocation3 + $0xb4] sm:$0xf] %v1543
      %1672 = vst [vmem:[#allocation3 + $0xb8] sm:$0xf] %v1544
      %1673 = vst [vmem:[#allocation3 + $0xbc] sm:$0xf] %v1545
      %1674 = vst [vmem:[#allocation3 + $0xc0] sm:$0xf] %v1546
      %1675 = vst [vmem:[#allocation3 + $0xc4] sm:$0xf] %v1547
      %1676 = vst [vmem:[#allocation3 + $0xc8] sm:$0xf] %v1548
      %1677 = vst [vmem:[#allocation3 + $0xcc] sm:$0xf] %v1549
      %1678 = vst [vmem:[#allocation3 + $0xd0] sm:$0xf] %v1550
      %1679 = vst [vmem:[#allocation3 + $0xd4] sm:$0xf] %v1551
      %1680 = vst [vmem:[#allocation3 + $0xd8] sm:$0xf] %v1552
      %1681 = vst [vmem:[#allocation3 + $0xdc] sm:$0xf] %v1553
      %1682 = vst [vmem:[#allocation3 + $0xe0] sm:$0xf] %v1554
      %1683 = vst [vmem:[#allocation3 + $0xe4] sm:$0xf] %v1555
      %1684 = vst [vmem:[#allocation3 + $0xe8] sm:$0xf] %v1556
      %1685 = vst [vmem:[#allocation3 + $0xec] sm:$0xf] %v1557
      %1686 = vst [vmem:[#allocation3 + $0xf0] sm:$0xf] %v1558
      %1687 = vst [vmem:[#allocation3 + $0xf4] sm:$0xf] %v1559
      %1688 = vst [vmem:[#allocation3 + $0xf8] sm:$0xf] %v1560
      %1689 = vst [vmem:[#allocation3 + $0xfc] sm:$0xf] %v1561
    $region25: #{matmul_scale_bias.1} parent=1 // pred_fallthru
      _
    // Predicated region
    $region26: #{matmul_scale_bias.1} parent=1 // pred_check
      _
    $region27: #{matmul_scale_bias.1} parent=1 // pred_check_branch
      %1691 = sbr.rel (0) target = $region29
    $region28: #{matmul_scale_bias.1} parent=1 // pred_region
      %s1693 = ssub.s32 4096, 4096
      %1694 = vsyncadd [#allocation4], %s1693
      %s1695 = sshll.u32 [#allocation3], 4
      %s1696 = int_to_ptr.vmem [resolvable:$true] %s1695
      %1701 = dma.vmem_to_hbm [thread:$0]  %s1696, 4096, %s4, [#allocation4], 64, 64, 4
    $region29: #{matmul_scale_bias.1} parent=1 // pred_fallthru
      _
    // Predicated region
    $region30: #{matmul_scale_bias.1} parent=1 // pred_check
      _
    $region31: #{matmul_scale_bias.1} parent=1 // pred_check_branch
      %1703 = sbr.rel (0) target = $region33
    $region32: #{matmul_scale_bias.1} parent=1 // pred_region
      %1704 = dma.done [#allocation4], 4096
    $region33: #{matmul_scale_bias.1} parent=1 // pred_fallthru
      _
    %1705 = vsyncpa [#allocation4], 1

</llo_original>
